<compile_context>
chip_gen: v7x
topology: tpu7x:2x2x1
jax: 0.10.0
libtpu: 0.0.40
codegen_flags: <defaults>
</compile_context>

<pallas_src>
import functools

import jax
import jax.numpy as jnp
from jax.experimental import pallas as pl
from jax.experimental.pallas import tpu as pltpu


def _gru_scan_kernel(gi_ref, whh_ref, bhhn_ref, out_ref):
    """Full T-step GRU recurrence for one direction (grid = (num_dir,)).

    gi_ref   : (1, 3, T, B, H)  precomputed input projections (+ folded biases),
                                gate order (r, z, n), for this direction.
    whh_ref  : (1, 3, H, H)     recurrent weights, pre-transposed so that
                                gh_g = h @ whh_ref[0, g].
    bhhn_ref : (1, 1, H)        recurrent bias of the n gate (not foldable: it
                                sits inside the r * (...) term).
    out_ref  : (1, T, B, H)     per-time-step hidden states for this direction.
    """
    d = pl.program_id(0)
    _, T, B, H = out_ref.shape

    # Loop-invariant loads, hoisted out of the serial recurrence.
    whh_r = whh_ref[0, 0]        # (H, H)
    whh_z = whh_ref[0, 1]
    whh_n = whh_ref[0, 2]
    bhh_n = bhhn_ref[0]          # (1, H)

    def step(t, h):
        # Forward direction walks t = 0..T-1, backward walks T-1..0.
        idx = jnp.where(d == 0, t, T - 1 - t)
        a_r = gi_ref[0, 0, idx]  # (B, H)
        a_z = gi_ref[0, 1, idx]
        a_n = gi_ref[0, 2, idx]

        hc = h.astype(whh_r.dtype)
        gh_r = jnp.dot(hc, whh_r, preferred_element_type=jnp.float32)
        gh_z = jnp.dot(hc, whh_z, preferred_element_type=jnp.float32)
        gh_n = jnp.dot(hc, whh_n, preferred_element_type=jnp.float32) + bhh_n

        r = jax.nn.sigmoid(a_r + gh_r)
        z = jax.nn.sigmoid(a_z + gh_z)
        n = jnp.tanh(a_n + r * gh_n)
        h_new = (1.0 - z) * n + z * h

        out_ref[0, idx] = h_new.astype(out_ref.dtype)
        return h_new

    h0 = jnp.zeros((B, H), jnp.float32)
    jax.lax.fori_loop(0, T, step, h0, unroll=(T <= 16))


def gru_pallas(x_btd, w_ih, w_hh, b_ih, b_hh, *, hidden_dim, bidirectional,
               compute_dtype=jnp.float32):
    """(Bi)directional single-layer GRU. Returns (num_dir, T, B, H) float32.

    w_ih: (num_dir, 3H, D), w_hh: (num_dir, 3H, H), b_ih/b_hh: (num_dir, 3H),
    with PyTorch's (r, z, n) gate order.
    """
    B, T, D = x_btd.shape
    H = hidden_dim
    num_dir = 2 if bidirectional else 1

    x = x_btd.astype(jnp.float32)
    w_ih = w_ih.astype(jnp.float32).reshape(num_dir, 3, H, D)
    w_hh = w_hh.astype(jnp.float32).reshape(num_dir, 3, H, H)
    b_ih = b_ih.astype(jnp.float32).reshape(num_dir, 3, H)
    b_hh = b_hh.astype(jnp.float32).reshape(num_dir, 3, H)

    # ---- Hoisted input projection: one big GEMM over all (dir, gate, t, b). ----
    w_ih_t = jnp.transpose(w_ih, (0, 1, 3, 2))                    # (n, 3, D, H)
    gi = jnp.einsum('btd,ngdh->ngtbh', x, w_ih_t,
                    preferred_element_type=jnp.float32)           # (n, 3, T, B, H)
    # b_ih (all gates) and b_hh of the r/z gates are additive outside any
    # multiplication, so they fold into the precomputed term; the n-gate
    # recurrent bias stays inside r * (...) and is passed separately.
    gate_fold = jnp.asarray([1.0, 1.0, 0.0], jnp.float32)[None, :, None]
    bias_fold = b_ih + b_hh * gate_fold                           # (n, 3, H)
    gi = gi + bias_fold[:, :, None, None, :]

    # ---- Recurrent weights: pre-transposed / gate-split for the kernel. ----
    whh_t = jnp.transpose(w_hh, (0, 1, 3, 2)).astype(compute_dtype)  # (n, 3, H, H)
    bhh_n = b_hh[:, 2:3, :]                                          # (n, 1, H)

    out = pl.pallas_call(
        _gru_scan_kernel,
        out_shape=jax.ShapeDtypeStruct((num_dir, T, B, H), jnp.float32),
        grid_spec=pltpu.PrefetchScalarGridSpec(
            num_scalar_prefetch=0,
            grid=(num_dir,),
            in_specs=[
                pl.BlockSpec((1, 3, T, B, H), lambda d: (d, 0, 0, 0, 0)),
                pl.BlockSpec((1, 3, H, H), lambda d: (d, 0, 0, 0)),
                pl.BlockSpec((1, 1, H), lambda d: (d, 0, 0)),
            ],
            out_specs=pl.BlockSpec((1, T, B, H), lambda d: (d, 0, 0, 0)),
        ),
        compiler_params=pltpu.CompilerParams(
            dimension_semantics=("parallel",)),
    )(gi, whh_t, bhh_n)
    return out


def video_encoder_forward(params, fea_video, config, *, compute_dtype=jnp.float32):
    """Mirrors VideoEncoder.forward: GRU backbone, then mean over directions."""
    H = config["attention_dim"]
    out = gru_pallas(
        fea_video, params["w_ih"], params["w_hh"], params["b_ih"], params["b_hh"],
        hidden_dim=H, bidirectional=config["gru_bidirection"],
        compute_dtype=compute_dtype)
    if config["gru_bidirection"]:
        # torch.cat([fwd, bwd], -1).view(B, T, 2, H).mean(2) == (fwd + bwd) / 2
        y = (out[0] + out[1]) * 0.5          # (T, B, H)
    else:
        y = out[0]                           # (T, B, H)
    return jnp.transpose(y, (1, 0, 2))       # (B, T, H) — batch_first, like PyTorch


# ---------------------------------------------------------------------------
# Pure-JAX reference (lax.scan) for correctness checking.
# ---------------------------------------------------------------------------
def gru_reference(x, w_ih, w_hh, b_ih, b_hh, H, bidirectional):
    B, T, D = x.shape

    def run_dir(d, xs):
        def step(h, xt):
            gi = xt @ w_ih[d].T + b_ih[d]
            gh = h @ w_hh[d].T + b_hh[d]
            r = jax.nn.sigmoid(gi[:, :H] + gh[:, :H])
            z = jax.nn.sigmoid(gi[:, H:2 * H] + gh[:, H:2 * H])
            n = jnp.tanh(gi[:, 2 * H:] + r * gh[:, 2 * H:])
            h_new = (1.0 - z) * n + z * h
            return h_new, h_new

        h0 = jnp.zeros((B, H), jnp.float32)
        _, ys = jax.lax.scan(step, h0, jnp.transpose(xs, (1, 0, 2)))
        return jnp.transpose(ys, (1, 0, 2))   # (B, T, H)

    fwd = run_dir(0, x)
    if not bidirectional:
        return fwd
    bwd = run_dir(1, x[:, ::-1, :])[:, ::-1, :]
    return (fwd + bwd) / 2.0


def init_params(key, config):
    """Deterministic synthetic params with PyTorch-GRU shapes/init (U(-k, k), k=1/sqrt(H))."""
    D = config["video_fea_dim"]
    H = config["attention_dim"]
    num_dir = 2 if config["gru_bidirection"] else 1
    k = 1.0 / jnp.sqrt(jnp.float32(H))
    k1, k2, k3, k4 = jax.random.split(key, 4)
    return {
        "w_ih": jax.random.uniform(k1, (num_dir, 3 * H, D), jnp.float32, -k, k),
        "w_hh": jax.random.uniform(k2, (num_dir, 3 * H, H), jnp.float32, -k, k),
        "b_ih": jax.random.uniform(k3, (num_dir, 3 * H), jnp.float32, -k, k),
        "b_hh": jax.random.uniform(k4, (num_dir, 3 * H), jnp.float32, -k, k),
    }


if __name__ == "__main__":
    config = {
        "video_fea_dim": 16,     # D
        "attention_dim": 32,     # H
        "gru_bidirection": True,
    }
    B, T = 2, 8

    key = jax.random.PRNGKey(0)
    k_x, k_p = jax.random.split(key)
    fea_video = jax.random.normal(k_x, (B, T, config["video_fea_dim"]), jnp.float32)
    params = init_params(k_p, config)

    fwd_fn = jax.jit(functools.partial(video_encoder_forward, config=config))
    out = fwd_fn(params, fea_video)
    out = jax.block_until_ready(out)
    assert out.shape == (B, T, config["attention_dim"]), out.shape

    ref = gru_reference(
        fea_video, params["w_ih"], params["w_hh"], params["b_ih"], params["b_hh"],
        config["attention_dim"], config["gru_bidirection"])
    assert jnp.allclose(out, ref, atol=1e-5, rtol=1e-5), \
        float(jnp.max(jnp.abs(out - ref)))

    print("KERNEL_OK")
</pallas_src>

<mosaic_0001>
module attributes {stable_mosaic.version = 11 : i64} {
  func.func @_gru_scan_kernel(%arg0: i32, %arg1: memref<1x3x8x2x32xf32, #tpu.memory_space<vmem>>, %arg2: memref<1x3x32x32xf32, #tpu.memory_space<vmem>>, %arg3: memref<1x1x32xf32, #tpu.memory_space<vmem>>, %arg4: memref<1x8x2x32xf32, #tpu.memory_space<vmem>>) attributes {dimension_semantics = [#tpu.dimension_semantics<parallel>], iteration_bounds = array<i64: 2>, scalar_prefetch = 0 : i64, scratch_operands = 0 : i64, tpu.core_type = #tpu.core_type<tc>, window_params = [{transform_indices = @transform_0, window_bounds = array<i64: 1, 3, 8, 2, 32>}, {transform_indices = @transform_1, window_bounds = array<i64: 1, 3, 32, 32>}, {transform_indices = @transform_2, window_bounds = array<i64: 1, 1, 32>}, {transform_indices = @transform_3, window_bounds = array<i64: 1, 8, 2, 32>}]} {
    %c0 = arith.constant 0 : index
    %c0_0 = arith.constant 0 : index
    %c0_1 = arith.constant 0 : index
    %c0_2 = arith.constant 0 : index
    %0 = vector.load %arg2[%c0, %c0_0, %c0_1, %c0_2] : memref<1x3x32x32xf32, #tpu.memory_space<vmem>>, vector<1x1x32x32xf32>
    %1 = vector.shape_cast %0 : vector<1x1x32x32xf32> to vector<32x32xf32>
    %c0_3 = arith.constant 0 : index
    %c1 = arith.constant 1 : index
    %c0_4 = arith.constant 0 : index
    %c0_5 = arith.constant 0 : index
    %2 = vector.load %arg2[%c0_3, %c1, %c0_4, %c0_5] : memref<1x3x32x32xf32, #tpu.memory_space<vmem>>, vector<1x1x32x32xf32>
    %3 = vector.shape_cast %2 : vector<1x1x32x32xf32> to vector<32x32xf32>
    %c0_6 = arith.constant 0 : index
    %c2 = arith.constant 2 : index
    %c0_7 = arith.constant 0 : index
    %c0_8 = arith.constant 0 : index
    %4 = vector.load %arg2[%c0_6, %c2, %c0_7, %c0_8] : memref<1x3x32x32xf32, #tpu.memory_space<vmem>>, vector<1x1x32x32xf32>
    %5 = vector.shape_cast %4 : vector<1x1x32x32xf32> to vector<32x32xf32>
    %c0_9 = arith.constant 0 : index
    %c0_10 = arith.constant 0 : index
    %c0_11 = arith.constant 0 : index
    %6 = vector.load %arg3[%c0_9, %c0_10, %c0_11] : memref<1x1x32xf32, #tpu.memory_space<vmem>>, vector<1x1x32xf32>
    %7 = vector.shape_cast %6 : vector<1x1x32xf32> to vector<1x32xf32>
    %cst = arith.constant 0.000000e+00 : f32
    %8 = vector.broadcast %cst : f32 to vector<2x32xf32>
    %c0_i32 = arith.constant 0 : i32
    %c0_i32_12 = arith.constant 0 : i32
    %9 = arith.cmpi eq, %arg0, %c0_i32_12 : i32
    %c7_i32 = arith.constant 7 : i32
    %10 = arith.subi %c7_i32, %c0_i32 : i32
    %11 = arith.select %9, %c0_i32, %10 : i32
    %c0_13 = arith.constant 0 : index
    %c0_14 = arith.constant 0 : index
    %12 = arith.index_cast %11 : i32 to index
    %c0_15 = arith.constant 0 : index
    %c0_16 = arith.constant 0 : index
    %13 = vector.load %arg1[%c0_13, %c0_14, %12, %c0_15, %c0_16] : memref<1x3x8x2x32xf32, #tpu.memory_space<vmem>>, vector<1x1x1x2x32xf32>
    %14 = vector.shape_cast %13 : vector<1x1x1x2x32xf32> to vector<2x32xf32>
    %c0_17 = arith.constant 0 : index
    %c1_18 = arith.constant 1 : index
    %15 = arith.index_cast %11 : i32 to index
    %c0_19 = arith.constant 0 : index
    %c0_20 = arith.constant 0 : index
    %16 = vector.load %arg1[%c0_17, %c1_18, %15, %c0_19, %c0_20] : memref<1x3x8x2x32xf32, #tpu.memory_space<vmem>>, vector<1x1x1x2x32xf32>
    %17 = vector.shape_cast %16 : vector<1x1x1x2x32xf32> to vector<2x32xf32>
    %c0_21 = arith.constant 0 : index
    %c2_22 = arith.constant 2 : index
    %18 = arith.index_cast %11 : i32 to index
    %c0_23 = arith.constant 0 : index
    %c0_24 = arith.constant 0 : index
    %19 = vector.load %arg1[%c0_21, %c2_22, %18, %c0_23, %c0_24] : memref<1x3x8x2x32xf32, #tpu.memory_space<vmem>>, vector<1x1x1x2x32xf32>
    %20 = vector.shape_cast %19 : vector<1x1x1x2x32xf32> to vector<2x32xf32>
    %cst_25 = arith.constant dense<0.000000e+00> : vector<2x32xf32>
    %21 = tpu.matmul %8, %1, %cst_25 {dimension_numbers = #tpu.dot_dimension_numbers<[1], [0], [0], [1], [0, 0, 1, 1], [], []>} : vector<2x32xf32>, vector<32x32xf32>, vector<2x32xf32> -> vector<2x32xf32>
    %cst_26 = arith.constant dense<0.000000e+00> : vector<2x32xf32>
    %22 = tpu.matmul %8, %3, %cst_26 {dimension_numbers = #tpu.dot_dimension_numbers<[1], [0], [0], [1], [0, 0, 1, 1], [], []>} : vector<2x32xf32>, vector<32x32xf32>, vector<2x32xf32> -> vector<2x32xf32>
    %cst_27 = arith.constant dense<0.000000e+00> : vector<2x32xf32>
    %23 = tpu.matmul %8, %5, %cst_27 {dimension_numbers = #tpu.dot_dimension_numbers<[1], [0], [0], [1], [0, 0, 1, 1], [], []>} : vector<2x32xf32>, vector<32x32xf32>, vector<2x32xf32> -> vector<2x32xf32>
    %24 = vector.broadcast %7 : vector<1x32xf32> to vector<2x32xf32>
    %25 = arith.addf %23, %24 : vector<2x32xf32>
    %26 = arith.addf %14, %21 : vector<2x32xf32>
    %27 = arith.negf %26 : vector<2x32xf32>
    %28 = math.exp %27 : vector<2x32xf32>
    %cst_28 = arith.constant 1.000000e+00 : f32
    %29 = vector.broadcast %cst_28 : f32 to vector<2x32xf32>
    %30 = arith.addf %29, %28 : vector<2x32xf32>
    %31 = arith.divf %29, %30 : vector<2x32xf32>
    %32 = arith.addf %17, %22 : vector<2x32xf32>
    %33 = arith.negf %32 : vector<2x32xf32>
    %34 = math.exp %33 : vector<2x32xf32>
    %cst_29 = arith.constant 1.000000e+00 : f32
    %35 = vector.broadcast %cst_29 : f32 to vector<2x32xf32>
    %36 = arith.addf %35, %34 : vector<2x32xf32>
    %37 = arith.divf %35, %36 : vector<2x32xf32>
    %38 = arith.mulf %31, %25 : vector<2x32xf32>
    %39 = arith.addf %20, %38 : vector<2x32xf32>
    %40 = math.tanh %39 : vector<2x32xf32>
    %cst_30 = arith.constant 1.000000e+00 : f32
    %41 = vector.broadcast %cst_30 : f32 to vector<2x32xf32>
    %42 = arith.subf %41, %37 : vector<2x32xf32>
    %43 = arith.mulf %42, %40 : vector<2x32xf32>
    %44 = arith.mulf %37, %8 : vector<2x32xf32>
    %45 = arith.addf %43, %44 : vector<2x32xf32>
    %c0_31 = arith.constant 0 : index
    %46 = arith.index_cast %11 : i32 to index
    %c0_32 = arith.constant 0 : index
    %c0_33 = arith.constant 0 : index
    %47 = vector.load %arg4[%c0_31, %46, %c0_32, %c0_33] : memref<1x8x2x32xf32, #tpu.memory_space<vmem>>, vector<1x1x2x32xf32>
    %48 = vector.shape_cast %47 : vector<1x1x2x32xf32> to vector<2x32xf32>
    %49 = vector.shape_cast %45 : vector<2x32xf32> to vector<1x1x2x32xf32>
    tpu.vector_store %arg4[%c0_31, %46, %c0_32, %c0_33], %49 {strides = array<i32>} : memref<1x8x2x32xf32, #tpu.memory_space<vmem>>, vector<1x1x2x32xf32>,
    %c1_i32 = arith.constant 1 : i32
    %c0_i32_34 = arith.constant 0 : i32
    %50 = arith.cmpi eq, %arg0, %c0_i32_34 : i32
    %c7_i32_35 = arith.constant 7 : i32
    %51 = arith.subi %c7_i32_35, %c1_i32 : i32
    %52 = arith.select %50, %c1_i32, %51 : i32
    %c0_36 = arith.constant 0 : index
    %c0_37 = arith.constant 0 : index
    %53 = arith.index_cast %52 : i32 to index
    %c0_38 = arith.constant 0 : index
    %c0_39 = arith.constant 0 : index
    %54 = vector.load %arg1[%c0_36, %c0_37, %53, %c0_38, %c0_39] : memref<1x3x8x2x32xf32, #tpu.memory_space<vmem>>, vector<1x1x1x2x32xf32>
    %55 = vector.shape_cast %54 : vector<1x1x1x2x32xf32> to vector<2x32xf32>
    %c0_40 = arith.constant 0 : index
    %c1_41 = arith.constant 1 : index
    %56 = arith.index_cast %52 : i32 to index
    %c0_42 = arith.constant 0 : index
    %c0_43 = arith.constant 0 : index
    %57 = vector.load %arg1[%c0_40, %c1_41, %56, %c0_42, %c0_43] : memref<1x3x8x2x32xf32, #tpu.memory_space<vmem>>, vector<1x1x1x2x32xf32>
    %58 = vector.shape_cast %57 : vector<1x1x1x2x32xf32> to vector<2x32xf32>
    %c0_44 = arith.constant 0 : index
    %c2_45 = arith.constant 2 : index
    %59 = arith.index_cast %52 : i32 to index
    %c0_46 = arith.constant 0 : index
    %c0_47 = arith.constant 0 : index
    %60 = vector.load %arg1[%c0_44, %c2_45, %59, %c0_46, %c0_47] : memref<1x3x8x2x32xf32, #tpu.memory_space<vmem>>, vector<1x1x1x2x32xf32>
    %61 = vector.shape_cast %60 : vector<1x1x1x2x32xf32> to vector<2x32xf32>
    %cst_48 = arith.constant dense<0.000000e+00> : vector<2x32xf32>
    %62 = tpu.matmul %45, %1, %cst_48 {dimension_numbers = #tpu.dot_dimension_numbers<[1], [0], [0], [1], [0, 0, 1, 1], [], []>} : vector<2x32xf32>, vector<32x32xf32>, vector<2x32xf32> -> vector<2x32xf32>
    %cst_49 = arith.constant dense<0.000000e+00> : vector<2x32xf32>
    %63 = tpu.matmul %45, %3, %cst_49 {dimension_numbers = #tpu.dot_dimension_numbers<[1], [0], [0], [1], [0, 0, 1, 1], [], []>} : vector<2x32xf32>, vector<32x32xf32>, vector<2x32xf32> -> vector<2x32xf32>
    %cst_50 = arith.constant dense<0.000000e+00> : vector<2x32xf32>
    %64 = tpu.matmul %45, %5, %cst_50 {dimension_numbers = #tpu.dot_dimension_numbers<[1], [0], [0], [1], [0, 0, 1, 1], [], []>} : vector<2x32xf32>, vector<32x32xf32>, vector<2x32xf32> -> vector<2x32xf32>
    %65 = vector.broadcast %7 : vector<1x32xf32> to vector<2x32xf32>
    %66 = arith.addf %64, %65 : vector<2x32xf32>
    %67 = arith.addf %55, %62 : vector<2x32xf32>
    %68 = arith.negf %67 : vector<2x32xf32>
    %69 = math.exp %68 : vector<2x32xf32>
    %cst_51 = arith.constant 1.000000e+00 : f32
    %70 = vector.broadcast %cst_51 : f32 to vector<2x32xf32>
    %71 = arith.addf %70, %69 : vector<2x32xf32>
    %72 = arith.divf %70, %71 : vector<2x32xf32>
    %73 = arith.addf %58, %63 : vector<2x32xf32>
    %74 = arith.negf %73 : vector<2x32xf32>
    %75 = math.exp %74 : vector<2x32xf32>
    %cst_52 = arith.constant 1.000000e+00 : f32
    %76 = vector.broadcast %cst_52 : f32 to vector<2x32xf32>
    %77 = arith.addf %76, %75 : vector<2x32xf32>
    %78 = arith.divf %76, %77 : vector<2x32xf32>
    %79 = arith.mulf %72, %66 : vector<2x32xf32>
    %80 = arith.addf %61, %79 : vector<2x32xf32>
    %81 = math.tanh %80 : vector<2x32xf32>
    %cst_53 = arith.constant 1.000000e+00 : f32
    %82 = vector.broadcast %cst_53 : f32 to vector<2x32xf32>
    %83 = arith.subf %82, %78 : vector<2x32xf32>
    %84 = arith.mulf %83, %81 : vector<2x32xf32>
    %85 = arith.mulf %78, %45 : vector<2x32xf32>
    %86 = arith.addf %84, %85 : vector<2x32xf32>
    %c0_54 = arith.constant 0 : index
    %87 = arith.index_cast %52 : i32 to index
    %c0_55 = arith.constant 0 : index
    %c0_56 = arith.constant 0 : index
    %88 = vector.load %arg4[%c0_54, %87, %c0_55, %c0_56] : memref<1x8x2x32xf32, #tpu.memory_space<vmem>>, vector<1x1x2x32xf32>
    %89 = vector.shape_cast %88 : vector<1x1x2x32xf32> to vector<2x32xf32>
    %90 = vector.shape_cast %86 : vector<2x32xf32> to vector<1x1x2x32xf32>
    tpu.vector_store %arg4[%c0_54, %87, %c0_55, %c0_56], %90 {strides = array<i32>} : memref<1x8x2x32xf32, #tpu.memory_space<vmem>>, vector<1x1x2x32xf32>,
    %c2_i32 = arith.constant 2 : i32
    %c0_i32_57 = arith.constant 0 : i32
    %91 = arith.cmpi eq, %arg0, %c0_i32_57 : i32
    %c7_i32_58 = arith.constant 7 : i32
    %92 = arith.subi %c7_i32_58, %c2_i32 : i32
    %93 = arith.select %91, %c2_i32, %92 : i32
    %c0_59 = arith.constant 0 : index
    %c0_60 = arith.constant 0 : index
    %94 = arith.index_cast %93 : i32 to index
    %c0_61 = arith.constant 0 : index
    %c0_62 = arith.constant 0 : index
    %95 = vector.load %arg1[%c0_59, %c0_60, %94, %c0_61, %c0_62] : memref<1x3x8x2x32xf32, #tpu.memory_space<vmem>>, vector<1x1x1x2x32xf32>
    %96 = vector.shape_cast %95 : vector<1x1x1x2x32xf32> to vector<2x32xf32>
    %c0_63 = arith.constant 0 : index
    %c1_64 = arith.constant 1 : index
    %97 = arith.index_cast %93 : i32 to index
    %c0_65 = arith.constant 0 : index
    %c0_66 = arith.constant 0 : index
    %98 = vector.load %arg1[%c0_63, %c1_64, %97, %c0_65, %c0_66] : memref<1x3x8x2x32xf32, #tpu.memory_space<vmem>>, vector<1x1x1x2x32xf32>
    %99 = vector.shape_cast %98 : vector<1x1x1x2x32xf32> to vector<2x32xf32>
    %c0_67 = arith.constant 0 : index
    %c2_68 = arith.constant 2 : index
    %100 = arith.index_cast %93 : i32 to index
    %c0_69 = arith.constant 0 : index
    %c0_70 = arith.constant 0 : index
    %101 = vector.load %arg1[%c0_67, %c2_68, %100, %c0_69, %c0_70] : memref<1x3x8x2x32xf32, #tpu.memory_space<vmem>>, vector<1x1x1x2x32xf32>
    %102 = vector.shape_cast %101 : vector<1x1x1x2x32xf32> to vector<2x32xf32>
    %cst_71 = arith.constant dense<0.000000e+00> : vector<2x32xf32>
    %103 = tpu.matmul %86, %1, %cst_71 {dimension_numbers = #tpu.dot_dimension_numbers<[1], [0], [0], [1], [0, 0, 1, 1], [], []>} : vector<2x32xf32>, vector<32x32xf32>, vector<2x32xf32> -> vector<2x32xf32>
    %cst_72 = arith.constant dense<0.000000e+00> : vector<2x32xf32>
    %104 = tpu.matmul %86, %3, %cst_72 {dimension_numbers = #tpu.dot_dimension_numbers<[1], [0], [0], [1], [0, 0, 1, 1], [], []>} : vector<2x32xf32>, vector<32x32xf32>, vector<2x32xf32> -> vector<2x32xf32>
    %cst_73 = arith.constant dense<0.000000e+00> : vector<2x32xf32>
    %105 = tpu.matmul %86, %5, %cst_73 {dimension_numbers = #tpu.dot_dimension_numbers<[1], [0], [0], [1], [0, 0, 1, 1], [], []>} : vector<2x32xf32>, vector<32x32xf32>, vector<2x32xf32> -> vector<2x32xf32>
    %106 = vector.broadcast %7 : vector<1x32xf32> to vector<2x32xf32>
    %107 = arith.addf %105, %106 : vector<2x32xf32>
    %108 = arith.addf %96, %103 : vector<2x32xf32>
    %109 = arith.negf %108 : vector<2x32xf32>
    %110 = math.exp %109 : vector<2x32xf32>
    %cst_74 = arith.constant 1.000000e+00 : f32
    %111 = vector.broadcast %cst_74 : f32 to vector<2x32xf32>
    %112 = arith.addf %111, %110 : vector<2x32xf32>
    %113 = arith.divf %111, %112 : vector<2x32xf32>
    %114 = arith.addf %99, %104 : vector<2x32xf32>
    %115 = arith.negf %114 : vector<2x32xf32>
    %116 = math.exp %115 : vector<2x32xf32>
    %cst_75 = arith.constant 1.000000e+00 : f32
    %117 = vector.broadcast %cst_75 : f32 to vector<2x32xf32>
    %118 = arith.addf %117, %116 : vector<2x32xf32>
    %119 = arith.divf %117, %118 : vector<2x32xf32>
    %120 = arith.mulf %113, %107 : vector<2x32xf32>
    %121 = arith.addf %102, %120 : vector<2x32xf32>
    %122 = math.tanh %121 : vector<2x32xf32>
    %cst_76 = arith.constant 1.000000e+00 : f32
    %123 = vector.broadcast %cst_76 : f32 to vector<2x32xf32>
    %124 = arith.subf %123, %119 : vector<2x32xf32>
    %125 = arith.mulf %124, %122 : vector<2x32xf32>
    %126 = arith.mulf %119, %86 : vector<2x32xf32>
    %127 = arith.addf %125, %126 : vector<2x32xf32>
    %c0_77 = arith.constant 0 : index
    %128 = arith.index_cast %93 : i32 to index
    %c0_78 = arith.constant 0 : index
    %c0_79 = arith.constant 0 : index
    %129 = vector.load %arg4[%c0_77, %128, %c0_78, %c0_79] : memref<1x8x2x32xf32, #tpu.memory_space<vmem>>, vector<1x1x2x32xf32>
    %130 = vector.shape_cast %129 : vector<1x1x2x32xf32> to vector<2x32xf32>
    %131 = vector.shape_cast %127 : vector<2x32xf32> to vector<1x1x2x32xf32>
    tpu.vector_store %arg4[%c0_77, %128, %c0_78, %c0_79], %131 {strides = array<i32>} : memref<1x8x2x32xf32, #tpu.memory_space<vmem>>, vector<1x1x2x32xf32>,
    %c3_i32 = arith.constant 3 : i32
    %c0_i32_80 = arith.constant 0 : i32
    %132 = arith.cmpi eq, %arg0, %c0_i32_80 : i32
    %c7_i32_81 = arith.constant 7 : i32
    %133 = arith.subi %c7_i32_81, %c3_i32 : i32
    %134 = arith.select %132, %c3_i32, %133 : i32
    %c0_82 = arith.constant 0 : index
    %c0_83 = arith.constant 0 : index
    %135 = arith.index_cast %134 : i32 to index
    %c0_84 = arith.constant 0 : index
    %c0_85 = arith.constant 0 : index
    %136 = vector.load %arg1[%c0_82, %c0_83, %135, %c0_84, %c0_85] : memref<1x3x8x2x32xf32, #tpu.memory_space<vmem>>, vector<1x1x1x2x32xf32>
    %137 = vector.shape_cast %136 : vector<1x1x1x2x32xf32> to vector<2x32xf32>
    %c0_86 = arith.constant 0 : index
    %c1_87 = arith.constant 1 : index
    %138 = arith.index_cast %134 : i32 to index
    %c0_88 = arith.constant 0 : index
    %c0_89 = arith.constant 0 : index
    %139 = vector.load %arg1[%c0_86, %c1_87, %138, %c0_88, %c0_89] : memref<1x3x8x2x32xf32, #tpu.memory_space<vmem>>, vector<1x1x1x2x32xf32>
    %140 = vector.shape_cast %139 : vector<1x1x1x2x32xf32> to vector<2x32xf32>
    %c0_90 = arith.constant 0 : index
    %c2_91 = arith.constant 2 : index
    %141 = arith.index_cast %134 : i32 to index
    %c0_92 = arith.constant 0 : index
    %c0_93 = arith.constant 0 : index
    %142 = vector.load %arg1[%c0_90, %c2_91, %141, %c0_92, %c0_93] : memref<1x3x8x2x32xf32, #tpu.memory_space<vmem>>, vector<1x1x1x2x32xf32>
    %143 = vector.shape_cast %142 : vector<1x1x1x2x32xf32> to vector<2x32xf32>
    %cst_94 = arith.constant dense<0.000000e+00> : vector<2x32xf32>
    %144 = tpu.matmul %127, %1, %cst_94 {dimension_numbers = #tpu.dot_dimension_numbers<[1], [0], [0], [1], [0, 0, 1, 1], [], []>} : vector<2x32xf32>, vector<32x32xf32>, vector<2x32xf32> -> vector<2x32xf32>
    %cst_95 = arith.constant dense<0.000000e+00> : vector<2x32xf32>
    %145 = tpu.matmul %127, %3, %cst_95 {dimension_numbers = #tpu.dot_dimension_numbers<[1], [0], [0], [1], [0, 0, 1, 1], [], []>} : vector<2x32xf32>, vector<32x32xf32>, vector<2x32xf32> -> vector<2x32xf32>
    %cst_96 = arith.constant dense<0.000000e+00> : vector<2x32xf32>
    %146 = tpu.matmul %127, %5, %cst_96 {dimension_numbers = #tpu.dot_dimension_numbers<[1], [0], [0], [1], [0, 0, 1, 1], [], []>} : vector<2x32xf32>, vector<32x32xf32>, vector<2x32xf32> -> vector<2x32xf32>
    %147 = vector.broadcast %7 : vector<1x32xf32> to vector<2x32xf32>
    %148 = arith.addf %146, %147 : vector<2x32xf32>
    %149 = arith.addf %137, %144 : vector<2x32xf32>
    %150 = arith.negf %149 : vector<2x32xf32>
    %151 = math.exp %150 : vector<2x32xf32>
    %cst_97 = arith.constant 1.000000e+00 : f32
    %152 = vector.broadcast %cst_97 : f32 to vector<2x32xf32>
    %153 = arith.addf %152, %151 : vector<2x32xf32>
    %154 = arith.divf %152, %153 : vector<2x32xf32>
    %155 = arith.addf %140, %145 : vector<2x32xf32>
    %156 = arith.negf %155 : vector<2x32xf32>
    %157 = math.exp %156 : vector<2x32xf32>
    %cst_98 = arith.constant 1.000000e+00 : f32
    %158 = vector.broadcast %cst_98 : f32 to vector<2x32xf32>
    %159 = arith.addf %158, %157 : vector<2x32xf32>
    %160 = arith.divf %158, %159 : vector<2x32xf32>
    %161 = arith.mulf %154, %148 : vector<2x32xf32>
    %162 = arith.addf %143, %161 : vector<2x32xf32>
    %163 = math.tanh %162 : vector<2x32xf32>
    %cst_99 = arith.constant 1.000000e+00 : f32
    %164 = vector.broadcast %cst_99 : f32 to vector<2x32xf32>
    %165 = arith.subf %164, %160 : vector<2x32xf32>
    %166 = arith.mulf %165, %163 : vector<2x32xf32>
    %167 = arith.mulf %160, %127 : vector<2x32xf32>
    %168 = arith.addf %166, %167 : vector<2x32xf32>
    %c0_100 = arith.constant 0 : index
    %169 = arith.index_cast %134 : i32 to index
    %c0_101 = arith.constant 0 : index
    %c0_102 = arith.constant 0 : index
    %170 = vector.load %arg4[%c0_100, %169, %c0_101, %c0_102] : memref<1x8x2x32xf32, #tpu.memory_space<vmem>>, vector<1x1x2x32xf32>
    %171 = vector.shape_cast %170 : vector<1x1x2x32xf32> to vector<2x32xf32>
    %172 = vector.shape_cast %168 : vector<2x32xf32> to vector<1x1x2x32xf32>
    tpu.vector_store %arg4[%c0_100, %169, %c0_101, %c0_102], %172 {strides = array<i32>} : memref<1x8x2x32xf32, #tpu.memory_space<vmem>>, vector<1x1x2x32xf32>,
    %c4_i32 = arith.constant 4 : i32
    %c0_i32_103 = arith.constant 0 : i32
    %173 = arith.cmpi eq, %arg0, %c0_i32_103 : i32
    %c7_i32_104 = arith.constant 7 : i32
    %174 = arith.subi %c7_i32_104, %c4_i32 : i32
    %175 = arith.select %173, %c4_i32, %174 : i32
    %c0_105 = arith.constant 0 : index
    %c0_106 = arith.constant 0 : index
    %176 = arith.index_cast %175 : i32 to index
    %c0_107 = arith.constant 0 : index
    %c0_108 = arith.constant 0 : index
    %177 = vector.load %arg1[%c0_105, %c0_106, %176, %c0_107, %c0_108] : memref<1x3x8x2x32xf32, #tpu.memory_space<vmem>>, vector<1x1x1x2x32xf32>
    %178 = vector.shape_cast %177 : vector<1x1x1x2x32xf32> to vector<2x32xf32>
    %c0_109 = arith.constant 0 : index
    %c1_110 = arith.constant 1 : index
    %179 = arith.index_cast %175 : i32 to index
    %c0_111 = arith.constant 0 : index
    %c0_112 = arith.constant 0 : index
    %180 = vector.load %arg1[%c0_109, %c1_110, %179, %c0_111, %c0_112] : memref<1x3x8x2x32xf32, #tpu.memory_space<vmem>>, vector<1x1x1x2x32xf32>
    %181 = vector.shape_cast %180 : vector<1x1x1x2x32xf32> to vector<2x32xf32>
    %c0_113 = arith.constant 0 : index
    %c2_114 = arith.constant 2 : index
    %182 = arith.index_cast %175 : i32 to index
    %c0_115 = arith.constant 0 : index
    %c0_116 = arith.constant 0 : index
    %183 = vector.load %arg1[%c0_113, %c2_114, %182, %c0_115, %c0_116] : memref<1x3x8x2x32xf32, #tpu.memory_space<vmem>>, vector<1x1x1x2x32xf32>
    %184 = vector.shape_cast %183 : vector<1x1x1x2x32xf32> to vector<2x32xf32>
    %cst_117 = arith.constant dense<0.000000e+00> : vector<2x32xf32>
    %185 = tpu.matmul %168, %1, %cst_117 {dimension_numbers = #tpu.dot_dimension_numbers<[1], [0], [0], [1], [0, 0, 1, 1], [], []>} : vector<2x32xf32>, vector<32x32xf32>, vector<2x32xf32> -> vector<2x32xf32>
    %cst_118 = arith.constant dense<0.000000e+00> : vector<2x32xf32>
    %186 = tpu.matmul %168, %3, %cst_118 {dimension_numbers = #tpu.dot_dimension_numbers<[1], [0], [0], [1], [0, 0, 1, 1], [], []>} : vector<2x32xf32>, vector<32x32xf32>, vector<2x32xf32> -> vector<2x32xf32>
    %cst_119 = arith.constant dense<0.000000e+00> : vector<2x32xf32>
    %187 = tpu.matmul %168, %5, %cst_119 {dimension_numbers = #tpu.dot_dimension_numbers<[1], [0], [0], [1], [0, 0, 1, 1], [], []>} : vector<2x32xf32>, vector<32x32xf32>, vector<2x32xf32> -> vector<2x32xf32>
    %188 = vector.broadcast %7 : vector<1x32xf32> to vector<2x32xf32>
    %189 = arith.addf %187, %188 : vector<2x32xf32>
    %190 = arith.addf %178, %185 : vector<2x32xf32>
    %191 = arith.negf %190 : vector<2x32xf32>
    %192 = math.exp %191 : vector<2x32xf32>
    %cst_120 = arith.constant 1.000000e+00 : f32
    %193 = vector.broadcast %cst_120 : f32 to vector<2x32xf32>
    %194 = arith.addf %193, %192 : vector<2x32xf32>
    %195 = arith.divf %193, %194 : vector<2x32xf32>
    %196 = arith.addf %181, %186 : vector<2x32xf32>
    %197 = arith.negf %196 : vector<2x32xf32>
    %198 = math.exp %197 : vector<2x32xf32>
    %cst_121 = arith.constant 1.000000e+00 : f32
    %199 = vector.broadcast %cst_121 : f32 to vector<2x32xf32>
    %200 = arith.addf %199, %198 : vector<2x32xf32>
    %201 = arith.divf %199, %200 : vector<2x32xf32>
    %202 = arith.mulf %195, %189 : vector<2x32xf32>
    %203 = arith.addf %184, %202 : vector<2x32xf32>
    %204 = math.tanh %203 : vector<2x32xf32>
    %cst_122 = arith.constant 1.000000e+00 : f32
    %205 = vector.broadcast %cst_122 : f32 to vector<2x32xf32>
    %206 = arith.subf %205, %201 : vector<2x32xf32>
    %207 = arith.mulf %206, %204 : vector<2x32xf32>
    %208 = arith.mulf %201, %168 : vector<2x32xf32>
    %209 = arith.addf %207, %208 : vector<2x32xf32>
    %c0_123 = arith.constant 0 : index
    %210 = arith.index_cast %175 : i32 to index
    %c0_124 = arith.constant 0 : index
    %c0_125 = arith.constant 0 : index
    %211 = vector.load %arg4[%c0_123, %210, %c0_124, %c0_125] : memref<1x8x2x32xf32, #tpu.memory_space<vmem>>, vector<1x1x2x32xf32>
    %212 = vector.shape_cast %211 : vector<1x1x2x32xf32> to vector<2x32xf32>
    %213 = vector.shape_cast %209 : vector<2x32xf32> to vector<1x1x2x32xf32>
    tpu.vector_store %arg4[%c0_123, %210, %c0_124, %c0_125], %213 {strides = array<i32>} : memref<1x8x2x32xf32, #tpu.memory_space<vmem>>, vector<1x1x2x32xf32>,
    %c5_i32 = arith.constant 5 : i32
    %c0_i32_126 = arith.constant 0 : i32
    %214 = arith.cmpi eq, %arg0, %c0_i32_126 : i32
    %c7_i32_127 = arith.constant 7 : i32
    %215 = arith.subi %c7_i32_127, %c5_i32 : i32
    %216 = arith.select %214, %c5_i32, %215 : i32
    %c0_128 = arith.constant 0 : index
    %c0_129 = arith.constant 0 : index
    %217 = arith.index_cast %216 : i32 to index
    %c0_130 = arith.constant 0 : index
    %c0_131 = arith.constant 0 : index
    %218 = vector.load %arg1[%c0_128, %c0_129, %217, %c0_130, %c0_131] : memref<1x3x8x2x32xf32, #tpu.memory_space<vmem>>, vector<1x1x1x2x32xf32>
    %219 = vector.shape_cast %218 : vector<1x1x1x2x32xf32> to vector<2x32xf32>
    %c0_132 = arith.constant 0 : index
    %c1_133 = arith.constant 1 : index
    %220 = arith.index_cast %216 : i32 to index
    %c0_134 = arith.constant 0 : index
    %c0_135 = arith.constant 0 : index
    %221 = vector.load %arg1[%c0_132, %c1_133, %220, %c0_134, %c0_135] : memref<1x3x8x2x32xf32, #tpu.memory_space<vmem>>, vector<1x1x1x2x32xf32>
    %222 = vector.shape_cast %221 : vector<1x1x1x2x32xf32> to vector<2x32xf32>
    %c0_136 = arith.constant 0 : index
    %c2_137 = arith.constant 2 : index
    %223 = arith.index_cast %216 : i32 to index
    %c0_138 = arith.constant 0 : index
    %c0_139 = arith.constant 0 : index
    %224 = vector.load %arg1[%c0_136, %c2_137, %223, %c0_138, %c0_139] : memref<1x3x8x2x32xf32, #tpu.memory_space<vmem>>, vector<1x1x1x2x32xf32>
    %225 = vector.shape_cast %224 : vector<1x1x1x2x32xf32> to vector<2x32xf32>
    %cst_140 = arith.constant dense<0.000000e+00> : vector<2x32xf32>
    %226 = tpu.matmul %209, %1, %cst_140 {dimension_numbers = #tpu.dot_dimension_numbers<[1], [0], [0], [1], [0, 0, 1, 1], [], []>} : vector<2x32xf32>, vector<32x32xf32>, vector<2x32xf32> -> vector<2x32xf32>
    %cst_141 = arith.constant dense<0.000000e+00> : vector<2x32xf32>
    %227 = tpu.matmul %209, %3, %cst_141 {dimension_numbers = #tpu.dot_dimension_numbers<[1], [0], [0], [1], [0, 0, 1, 1], [], []>} : vector<2x32xf32>, vector<32x32xf32>, vector<2x32xf32> -> vector<2x32xf32>
    %cst_142 = arith.constant dense<0.000000e+00> : vector<2x32xf32>
    %228 = tpu.matmul %209, %5, %cst_142 {dimension_numbers = #tpu.dot_dimension_numbers<[1], [0], [0], [1], [0, 0, 1, 1], [], []>} : vector<2x32xf32>, vector<32x32xf32>, vector<2x32xf32> -> vector<2x32xf32>
    %229 = vector.broadcast %7 : vector<1x32xf32> to vector<2x32xf32>
    %230 = arith.addf %228, %229 : vector<2x32xf32>
    %231 = arith.addf %219, %226 : vector<2x32xf32>
    %232 = arith.negf %231 : vector<2x32xf32>
    %233 = math.exp %232 : vector<2x32xf32>
    %cst_143 = arith.constant 1.000000e+00 : f32
    %234 = vector.broadcast %cst_143 : f32 to vector<2x32xf32>
    %235 = arith.addf %234, %233 : vector<2x32xf32>
    %236 = arith.divf %234, %235 : vector<2x32xf32>
    %237 = arith.addf %222, %227 : vector<2x32xf32>
    %238 = arith.negf %237 : vector<2x32xf32>
    %239 = math.exp %238 : vector<2x32xf32>
    %cst_144 = arith.constant 1.000000e+00 : f32
    %240 = vector.broadcast %cst_144 : f32 to vector<2x32xf32>
    %241 = arith.addf %240, %239 : vector<2x32xf32>
    %242 = arith.divf %240, %241 : vector<2x32xf32>
    %243 = arith.mulf %236, %230 : vector<2x32xf32>
    %244 = arith.addf %225, %243 : vector<2x32xf32>
    %245 = math.tanh %244 : vector<2x32xf32>
    %cst_145 = arith.constant 1.000000e+00 : f32
    %246 = vector.broadcast %cst_145 : f32 to vector<2x32xf32>
    %247 = arith.subf %246, %242 : vector<2x32xf32>
    %248 = arith.mulf %247, %245 : vector<2x32xf32>
    %249 = arith.mulf %242, %209 : vector<2x32xf32>
    %250 = arith.addf %248, %249 : vector<2x32xf32>
    %c0_146 = arith.constant 0 : index
    %251 = arith.index_cast %216 : i32 to index
    %c0_147 = arith.constant 0 : index
    %c0_148 = arith.constant 0 : index
    %252 = vector.load %arg4[%c0_146, %251, %c0_147, %c0_148] : memref<1x8x2x32xf32, #tpu.memory_space<vmem>>, vector<1x1x2x32xf32>
    %253 = vector.shape_cast %252 : vector<1x1x2x32xf32> to vector<2x32xf32>
    %254 = vector.shape_cast %250 : vector<2x32xf32> to vector<1x1x2x32xf32>
    tpu.vector_store %arg4[%c0_146, %251, %c0_147, %c0_148], %254 {strides = array<i32>} : memref<1x8x2x32xf32, #tpu.memory_space<vmem>>, vector<1x1x2x32xf32>,
    %c6_i32 = arith.constant 6 : i32
    %c0_i32_149 = arith.constant 0 : i32
    %255 = arith.cmpi eq, %arg0, %c0_i32_149 : i32
    %c7_i32_150 = arith.constant 7 : i32
    %256 = arith.subi %c7_i32_150, %c6_i32 : i32
    %257 = arith.select %255, %c6_i32, %256 : i32
    %c0_151 = arith.constant 0 : index
    %c0_152 = arith.constant 0 : index
    %258 = arith.index_cast %257 : i32 to index
    %c0_153 = arith.constant 0 : index
    %c0_154 = arith.constant 0 : index
    %259 = vector.load %arg1[%c0_151, %c0_152, %258, %c0_153, %c0_154] : memref<1x3x8x2x32xf32, #tpu.memory_space<vmem>>, vector<1x1x1x2x32xf32>
    %260 = vector.shape_cast %259 : vector<1x1x1x2x32xf32> to vector<2x32xf32>
    %c0_155 = arith.constant 0 : index
    %c1_156 = arith.constant 1 : index
    %261 = arith.index_cast %257 : i32 to index
    %c0_157 = arith.constant 0 : index
    %c0_158 = arith.constant 0 : index
    %262 = vector.load %arg1[%c0_155, %c1_156, %261, %c0_157, %c0_158] : memref<1x3x8x2x32xf32, #tpu.memory_space<vmem>>, vector<1x1x1x2x32xf32>
    %263 = vector.shape_cast %262 : vector<1x1x1x2x32xf32> to vector<2x32xf32>
    %c0_159 = arith.constant 0 : index
    %c2_160 = arith.constant 2 : index
    %264 = arith.index_cast %257 : i32 to index
    %c0_161 = arith.constant 0 : index
    %c0_162 = arith.constant 0 : index
    %265 = vector.load %arg1[%c0_159, %c2_160, %264, %c0_161, %c0_162] : memref<1x3x8x2x32xf32, #tpu.memory_space<vmem>>, vector<1x1x1x2x32xf32>
    %266 = vector.shape_cast %265 : vector<1x1x1x2x32xf32> to vector<2x32xf32>
    %cst_163 = arith.constant dense<0.000000e+00> : vector<2x32xf32>
    %267 = tpu.matmul %250, %1, %cst_163 {dimension_numbers = #tpu.dot_dimension_numbers<[1], [0], [0], [1], [0, 0, 1, 1], [], []>} : vector<2x32xf32>, vector<32x32xf32>, vector<2x32xf32> -> vector<2x32xf32>
    %cst_164 = arith.constant dense<0.000000e+00> : vector<2x32xf32>
    %268 = tpu.matmul %250, %3, %cst_164 {dimension_numbers = #tpu.dot_dimension_numbers<[1], [0], [0], [1], [0, 0, 1, 1], [], []>} : vector<2x32xf32>, vector<32x32xf32>, vector<2x32xf32> -> vector<2x32xf32>
    %cst_165 = arith.constant dense<0.000000e+00> : vector<2x32xf32>
    %269 = tpu.matmul %250, %5, %cst_165 {dimension_numbers = #tpu.dot_dimension_numbers<[1], [0], [0], [1], [0, 0, 1, 1], [], []>} : vector<2x32xf32>, vector<32x32xf32>, vector<2x32xf32> -> vector<2x32xf32>
    %270 = vector.broadcast %7 : vector<1x32xf32> to vector<2x32xf32>
    %271 = arith.addf %269, %270 : vector<2x32xf32>
    %272 = arith.addf %260, %267 : vector<2x32xf32>
    %273 = arith.negf %272 : vector<2x32xf32>
    %274 = math.exp %273 : vector<2x32xf32>
    %cst_166 = arith.constant 1.000000e+00 : f32
    %275 = vector.broadcast %cst_166 : f32 to vector<2x32xf32>
    %276 = arith.addf %275, %274 : vector<2x32xf32>
    %277 = arith.divf %275, %276 : vector<2x32xf32>
    %278 = arith.addf %263, %268 : vector<2x32xf32>
    %279 = arith.negf %278 : vector<2x32xf32>
    %280 = math.exp %279 : vector<2x32xf32>
    %cst_167 = arith.constant 1.000000e+00 : f32
    %281 = vector.broadcast %cst_167 : f32 to vector<2x32xf32>
    %282 = arith.addf %281, %280 : vector<2x32xf32>
    %283 = arith.divf %281, %282 : vector<2x32xf32>
    %284 = arith.mulf %277, %271 : vector<2x32xf32>
    %285 = arith.addf %266, %284 : vector<2x32xf32>
    %286 = math.tanh %285 : vector<2x32xf32>
    %cst_168 = arith.constant 1.000000e+00 : f32
    %287 = vector.broadcast %cst_168 : f32 to vector<2x32xf32>
    %288 = arith.subf %287, %283 : vector<2x32xf32>
    %289 = arith.mulf %288, %286 : vector<2x32xf32>
    %290 = arith.mulf %283, %250 : vector<2x32xf32>
    %291 = arith.addf %289, %290 : vector<2x32xf32>
    %c0_169 = arith.constant 0 : index
    %292 = arith.index_cast %257 : i32 to index
    %c0_170 = arith.constant 0 : index
    %c0_171 = arith.constant 0 : index
    %293 = vector.load %arg4[%c0_169, %292, %c0_170, %c0_171] : memref<1x8x2x32xf32, #tpu.memory_space<vmem>>, vector<1x1x2x32xf32>
    %294 = vector.shape_cast %293 : vector<1x1x2x32xf32> to vector<2x32xf32>
    %295 = vector.shape_cast %291 : vector<2x32xf32> to vector<1x1x2x32xf32>
    tpu.vector_store %arg4[%c0_169, %292, %c0_170, %c0_171], %295 {strides = array<i32>} : memref<1x8x2x32xf32, #tpu.memory_space<vmem>>, vector<1x1x2x32xf32>,
    %c7_i32_172 = arith.constant 7 : i32
    %c0_i32_173 = arith.constant 0 : i32
    %296 = arith.cmpi eq, %arg0, %c0_i32_173 : i32
    %c7_i32_174 = arith.constant 7 : i32
    %297 = arith.subi %c7_i32_174, %c7_i32_172 : i32
    %298 = arith.select %296, %c7_i32_172, %297 : i32
    %c0_175 = arith.constant 0 : index
    %c0_176 = arith.constant 0 : index
    %299 = arith.index_cast %298 : i32 to index
    %c0_177 = arith.constant 0 : index
    %c0_178 = arith.constant 0 : index
    %300 = vector.load %arg1[%c0_175, %c0_176, %299, %c0_177, %c0_178] : memref<1x3x8x2x32xf32, #tpu.memory_space<vmem>>, vector<1x1x1x2x32xf32>
    %301 = vector.shape_cast %300 : vector<1x1x1x2x32xf32> to vector<2x32xf32>
    %c0_179 = arith.constant 0 : index
    %c1_180 = arith.constant 1 : index
    %302 = arith.index_cast %298 : i32 to index
    %c0_181 = arith.constant 0 : index
    %c0_182 = arith.constant 0 : index
    %303 = vector.load %arg1[%c0_179, %c1_180, %302, %c0_181, %c0_182] : memref<1x3x8x2x32xf32, #tpu.memory_space<vmem>>, vector<1x1x1x2x32xf32>
    %304 = vector.shape_cast %303 : vector<1x1x1x2x32xf32> to vector<2x32xf32>
    %c0_183 = arith.constant 0 : index
    %c2_184 = arith.constant 2 : index
    %305 = arith.index_cast %298 : i32 to index
    %c0_185 = arith.constant 0 : index
    %c0_186 = arith.constant 0 : index
    %306 = vector.load %arg1[%c0_183, %c2_184, %305, %c0_185, %c0_186] : memref<1x3x8x2x32xf32, #tpu.memory_space<vmem>>, vector<1x1x1x2x32xf32>
    %307 = vector.shape_cast %306 : vector<1x1x1x2x32xf32> to vector<2x32xf32>
    %cst_187 = arith.constant dense<0.000000e+00> : vector<2x32xf32>
    %308 = tpu.matmul %291, %1, %cst_187 {dimension_numbers = #tpu.dot_dimension_numbers<[1], [0], [0], [1], [0, 0, 1, 1], [], []>} : vector<2x32xf32>, vector<32x32xf32>, vector<2x32xf32> -> vector<2x32xf32>
    %cst_188 = arith.constant dense<0.000000e+00> : vector<2x32xf32>
    %309 = tpu.matmul %291, %3, %cst_188 {dimension_numbers = #tpu.dot_dimension_numbers<[1], [0], [0], [1], [0, 0, 1, 1], [], []>} : vector<2x32xf32>, vector<32x32xf32>, vector<2x32xf32> -> vector<2x32xf32>
    %cst_189 = arith.constant dense<0.000000e+00> : vector<2x32xf32>
    %310 = tpu.matmul %291, %5, %cst_189 {dimension_numbers = #tpu.dot_dimension_numbers<[1], [0], [0], [1], [0, 0, 1, 1], [], []>} : vector<2x32xf32>, vector<32x32xf32>, vector<2x32xf32> -> vector<2x32xf32>
    %311 = vector.broadcast %7 : vector<1x32xf32> to vector<2x32xf32>
    %312 = arith.addf %310, %311 : vector<2x32xf32>
    %313 = arith.addf %301, %308 : vector<2x32xf32>
    %314 = arith.negf %313 : vector<2x32xf32>
    %315 = math.exp %314 : vector<2x32xf32>
    %cst_190 = arith.constant 1.000000e+00 : f32
    %316 = vector.broadcast %cst_190 : f32 to vector<2x32xf32>
    %317 = arith.addf %316, %315 : vector<2x32xf32>
    %318 = arith.divf %316, %317 : vector<2x32xf32>
    %319 = arith.addf %304, %309 : vector<2x32xf32>
    %320 = arith.negf %319 : vector<2x32xf32>
    %321 = math.exp %320 : vector<2x32xf32>
    %cst_191 = arith.constant 1.000000e+00 : f32
    %322 = vector.broadcast %cst_191 : f32 to vector<2x32xf32>
    %323 = arith.addf %322, %321 : vector<2x32xf32>
    %324 = arith.divf %322, %323 : vector<2x32xf32>
    %325 = arith.mulf %318, %312 : vector<2x32xf32>
    %326 = arith.addf %307, %325 : vector<2x32xf32>
    %327 = math.tanh %326 : vector<2x32xf32>
    %cst_192 = arith.constant 1.000000e+00 : f32
    %328 = vector.broadcast %cst_192 : f32 to vector<2x32xf32>
    %329 = arith.subf %328, %324 : vector<2x32xf32>
    %330 = arith.mulf %329, %327 : vector<2x32xf32>
    %331 = arith.mulf %324, %291 : vector<2x32xf32>
    %332 = arith.addf %330, %331 : vector<2x32xf32>
    %c0_193 = arith.constant 0 : index
    %333 = arith.index_cast %298 : i32 to index
    %c0_194 = arith.constant 0 : index
    %c0_195 = arith.constant 0 : index
    %334 = vector.load %arg4[%c0_193, %333, %c0_194, %c0_195] : memref<1x8x2x32xf32, #tpu.memory_space<vmem>>, vector<1x1x2x32xf32>
    %335 = vector.shape_cast %334 : vector<1x1x2x32xf32> to vector<2x32xf32>
    %336 = vector.shape_cast %332 : vector<2x32xf32> to vector<1x1x2x32xf32>
    tpu.vector_store %arg4[%c0_193, %333, %c0_194, %c0_195], %336 {strides = array<i32>} : memref<1x8x2x32xf32, #tpu.memory_space<vmem>>, vector<1x1x2x32xf32>,
    %c8_i32 = arith.constant 8 : i32
    return
  }
  func.func @transform_0(%arg0: i32) -> (i32, i32, i32, i32, i32) {
    %c0_i32 = arith.constant 0 : i32
    %c0_i32_0 = arith.constant 0 : i32
    %c0_i32_1 = arith.constant 0 : i32
    %c0_i32_2 = arith.constant 0 : i32
    %c0_i32_3 = arith.constant 0 : i32
    return %arg0, %c0_i32, %c0_i32_0, %c0_i32_1, %c0_i32_2 : i32, i32, i32, i32, i32
  }
  func.func @transform_1(%arg0: i32) -> (i32, i32, i32, i32) {
    %c0_i32 = arith.constant 0 : i32
    %c0_i32_0 = arith.constant 0 : i32
    %c0_i32_1 = arith.constant 0 : i32
    %c0_i32_2 = arith.constant 0 : i32
    return %arg0, %c0_i32, %c0_i32_0, %c0_i32_1 : i32, i32, i32, i32
  }
  func.func @transform_2(%arg0: i32) -> (i32, i32, i32) {
    %c0_i32 = arith.constant 0 : i32
    %c0_i32_0 = arith.constant 0 : i32
    %c0_i32_1 = arith.constant 0 : i32
    return %arg0, %c0_i32, %c0_i32_0 : i32, i32, i32
  }
  func.func @transform_3(%arg0: i32) -> (i32, i32, i32, i32) {
    %c0_i32 = arith.constant 0 : i32
    %c0_i32_0 = arith.constant 0 : i32
    %c0_i32_1 = arith.constant 0 : i32
    %c0_i32_2 = arith.constant 0 : i32
    return %arg0, %c0_i32, %c0_i32_0, %c0_i32_1 : i32, i32, i32, i32
  }
}

</mosaic_0001>

<llo_original>
// kernel: video_encoder_forward.1
$region0: #{video_encoder_forward.1}
  #allocation0 [shape = 'u32[]', space=smem, size = 0x4, offset = 0x4, fixed_abs, tag = 'smem constant byte address 0x4 - core index']
  #allocation1 [shape = 'u32[144,128]{1,0:T(1,128)}', space=vmem, size = 0x12000, scoped, tag = 'internal scratch']
  %s0 = inlined_call_operand.vmem [shape: f32[2,3,8,2,32], index: 0, kind: input, shape index: {}]
  %s1 = inlined_call_operand.vmem [shape: f32[2,3,32,32], index: 1, kind: input, shape index: {}]
  %s2 = inlined_call_operand.vmem [shape: f32[2,1,32], index: 2, kind: input, shape index: {}]
  %s3 = inlined_call_operand.vmem [shape: f32[2,8,2,32], index: 3, kind: output, shape index: {}]
  %s4 = sld [smem:[#allocation0]]
  $region45: #{video_encoder_forward.1} parent=0
    _
  %s6 = ssub.s32 1, %s4
  %s7 = scalar_select 0, %s6, %s4
  loop: start=0, step=1, limit=4
  $region2: #{video_encoder_forward.1} parent=0 // loop_pre_header
    _
  $region3: #{video_encoder_forward.1} parent=0 // loop_header
    %s9 = sphi 0, %s13
    %p10 = scmp.ge.s32.totalorder %s9, 4
    %s19 = sphi 0, %s21
    %s22 = sphi 0, %s19
    %s23 = sphi 0, %s22
    %s39 = sphi 0, %s23
    %s45 = sphi 0, %s47
    %s48 = sphi 0, %s45
    %s49 = sphi 0, %s48
    %s65 = sphi 0, %s49
    %s71 = sphi 0, %s73
    %s74 = sphi 0, %s71
    %s75 = sphi 0, %s74
    %s91 = sphi 0, %s75
    %s97 = sphi 0, %s99
    %s100 = sphi 0, %s97
    %s101 = sphi 0, %s100
    %s117 = sphi 0, %s101
  $region4: #{video_encoder_forward.1} parent=0 // loop_header_branch
    %12 = sbr.rel (%p10) target = $region8
  $region5: #{video_encoder_forward.1} parent=0 // loop_body
    %s14 = ssub.s32 %s9, 1
    %s15 = ssub.s32 %s9, 2
    %s16 = sadd.s32 %s9, 1
    %s17 = ssub.s32 %s9, %s16
    %p18 = scmp.eq.s32.totalorder %s17, 0
    %s20 = sadd.s32 %s19, 1
    %s21 = scalar_select %p18, %s19, %s20
    %p24 = pneg %p18
    %p25 = scmp.eq.s32.totalorder %s9, 1
    %p26 = por %p24, %p25
    %p27 = scmp.ne.s32.totalorder %s19, %s22
    %p28 = scmp.eq.s32.totalorder %s9, 0
    %p29 = por %p27, %p28
    %p30 = scmp.ne.s32.totalorder %s19, %s22
    %p31 = scmp.eq.s32.totalorder %s14, 1
    %p32 = por %p30, %p31
    %p33 = scmp.ne.s32.totalorder %s22, %s23
    %p34 = scmp.eq.s32.totalorder %s14, 0
    %p35 = por %p33, %p34
    %p36 = scmp.ne.s32.totalorder %s22, %s23
    %p37 = scmp.eq.s32.totalorder %s15, 1
    %p38 = por %p36, %p37
    %p40 = scmp.ne.s32.totalorder %s23, %s39
    %p41 = scmp.eq.s32.totalorder %s15, 0
    %p42 = por %p40, %p41
    %s43 = ssub.s32 %s9, %s16
    %p44 = scmp.eq.s32.totalorder %s43, 0
    %s46 = sadd.s32 %s45, 1
    %s47 = scalar_select %p44, %s45, %s46
    %p50 = pneg %p44
    %p51 = scmp.eq.s32.totalorder %s9, 1
    %p52 = por %p50, %p51
    %p53 = scmp.ne.s32.totalorder %s45, %s48
    %p54 = scmp.eq.s32.totalorder %s9, 0
    %p55 = por %p53, %p54
    %p56 = scmp.ne.s32.totalorder %s45, %s48
    %p57 = scmp.eq.s32.totalorder %s14, 1
    %p58 = por %p56, %p57
    %p59 = scmp.ne.s32.totalorder %s48, %s49
    %p60 = scmp.eq.s32.totalorder %s14, 0
    %p61 = por %p59, %p60
    %p62 = scmp.ne.s32.totalorder %s48, %s49
    %p63 = scmp.eq.s32.totalorder %s15, 1
    %p64 = por %p62, %p63
    %p66 = scmp.ne.s32.totalorder %s49, %s65
    %p67 = scmp.eq.s32.totalorder %s15, 0
    %p68 = por %p66, %p67
    %s69 = ssub.s32 %s9, %s16
    %p70 = scmp.eq.s32.totalorder %s69, 0
    %s72 = sadd.s32 %s71, 1
    %s73 = scalar_select %p70, %s71, %s72
    %p76 = pneg %p70
    %p77 = scmp.eq.s32.totalorder %s9, 1
    %p78 = por %p76, %p77
    %p79 = scmp.ne.s32.totalorder %s71, %s74
    %p80 = scmp.eq.s32.totalorder %s9, 0
    %p81 = por %p79, %p80
    %p82 = scmp.ne.s32.totalorder %s71, %s74
    %p83 = scmp.eq.s32.totalorder %s14, 1
    %p84 = por %p82, %p83
    %p85 = scmp.ne.s32.totalorder %s74, %s75
    %p86 = scmp.eq.s32.totalorder %s14, 0
    %p87 = por %p85, %p86
    %p88 = scmp.ne.s32.totalorder %s74, %s75
    %p89 = scmp.eq.s32.totalorder %s15, 1
    %p90 = por %p88, %p89
    %p92 = scmp.ne.s32.totalorder %s75, %s91
    %p93 = scmp.eq.s32.totalorder %s15, 0
    %p94 = por %p92, %p93
    %s95 = ssub.s32 %s9, %s16
    %p96 = scmp.eq.s32.totalorder %s95, 0
    %s98 = sadd.s32 %s97, 1
    %s99 = scalar_select %p96, %s97, %s98
    %p102 = pneg %p96
    %p103 = scmp.eq.s32.totalorder %s9, 1
    %p104 = por %p102, %p103
    %p105 = scmp.ne.s32.totalorder %s97, %s100
    %p106 = scmp.eq.s32.totalorder %s9, 0
    %p107 = por %p105, %p106
    %p108 = scmp.ne.s32.totalorder %s97, %s100
    %p109 = scmp.eq.s32.totalorder %s14, 1
    %p110 = por %p108, %p109
    %p111 = scmp.ne.s32.totalorder %s100, %s101
    %p112 = scmp.eq.s32.totalorder %s14, 0
    %p113 = por %p111, %p112
    %p114 = scmp.ne.s32.totalorder %s100, %s101
    %p115 = scmp.eq.s32.totalorder %s15, 1
    %p116 = por %p114, %p115
    %p118 = scmp.ne.s32.totalorder %s101, %s117
    %p119 = scmp.eq.s32.totalorder %s15, 0
    %p120 = por %p118, %p119
    %p121 = scmp.le.s32.totalorder 1, %s9
    %p122 = scmp.lt.s32.totalorder %s9, 3
    %p123 = pnand %p121, %p122
    %p124 = pneg %p123
    // Predicated region
    $region9: #{video_encoder_forward.1} parent=5 // pred_check
      _
    $region10: #{video_encoder_forward.1} parent=5 // pred_check_branch
      %126 = sbr.rel (%p123) target = $region12
    $region11: #{video_encoder_forward.1} parent=5 // pred_region
      %s127 = ssub.s32 %s9, 1
    $region12: #{video_encoder_forward.1} parent=5 // pred_fallthru
      _
    %p128 = scmp.lt.s32.totalorder %s9, 2
    // Predicated region
    $region13: #{video_encoder_forward.1} parent=5 // pred_check
      %p129 = pneg %p128
    $region14: #{video_encoder_forward.1} parent=5 // pred_check_branch
      %131 = sbr.rel (%p129) target = $region16
    $region15: #{video_encoder_forward.1} parent=5 // pred_region
      // Predicated region
      $region17: #{video_encoder_forward.1} parent=15 // pred_check
        %p132 = pneg %p29
      $region18: #{video_encoder_forward.1} parent=15 // pred_check_branch
        %134 = sbr.rel (%p132) target = $region20
      $region19: #{video_encoder_forward.1} parent=15 // pred_region
        %p135 = scmp.lt.s32.totalorder %s9, 1
        %s136 = scalar_select %p135, %s9, 1
        %s137 = smul.addr %s136, 24
        %s138 = smul.addr %s137, 2
        %s139 = scalar_lea.vmem %s0, %s138
      $region20: #{video_encoder_forward.1} parent=15 // pred_fallthru
        _
      // Predicated region
      $region21: #{video_encoder_forward.1} parent=15 // pred_check
        %p140 = pneg %p55
      $region22: #{video_encoder_forward.1} parent=15 // pred_check_branch
        %142 = sbr.rel (%p140) target = $region24
      $region23: #{video_encoder_forward.1} parent=15 // pred_region
        %p143 = scmp.lt.s32.totalorder %s9, 1
        %s144 = scalar_select %p143, %s9, 1
        %s145 = smul.addr %s144, 12
        %s146 = smul.addr %s145, 8
        %s147 = scalar_lea.vmem %s1, %s146
      $region24: #{video_encoder_forward.1} parent=15 // pred_fallthru
        _
      // Predicated region
      $region25: #{video_encoder_forward.1} parent=15 // pred_check
        %p148 = pneg %p81
      $region26: #{video_encoder_forward.1} parent=15 // pred_check_branch
        %150 = sbr.rel (%p148) target = $region28
      $region27: #{video_encoder_forward.1} parent=15 // pred_region
        %p151 = scmp.lt.s32.totalorder %s9, 1
        %s152 = scalar_select %p151, %s9, 1
        %s153 = scalar_lea.vmem %s2, %s152
      $region28: #{video_encoder_forward.1} parent=15 // pred_fallthru
        _
    $region16: #{video_encoder_forward.1} parent=5 // pred_fallthru
      _
    %p154 = scmp.le.s32.totalorder 1, %s9
    %p155 = scmp.lt.s32.totalorder %s9, 3
    %p156 = pnand %p154, %p155
    %p157 = pneg %p156
    // Predicated region
    $region29: #{video_encoder_forward.1} parent=5 // pred_check
      _
    $region30: #{video_encoder_forward.1} parent=5 // pred_check_branch
      %159 = sbr.rel (%p156) target = $region32
    $region31: #{video_encoder_forward.1} parent=5 // pred_region
      %s160 = ssub.s32 %s9, 1
      %p161 = scmp.lt.s32.totalorder %s14, 1
      %s162 = scalar_select %p161, %s14, 1
      %s163 = smul.addr %s162, 24
      %s164 = smul.addr %s163, 2
      %s165 = scalar_lea.vmem %s0, %s164
      %p166 = pneg %p35
      %p167 = pneg %p32
      %p168 = scmp.lt.s32.totalorder %s14, 1
      %s169 = scalar_select %p168, %s14, 1
      %s170 = smul.addr %s169, 12
      %s171 = smul.addr %s170, 8
      %s172 = scalar_lea.vmem %s1, %s171
      %p173 = pneg %p61
      %p174 = pneg %p58
      %p175 = scmp.lt.s32.totalorder %s14, 1
      %s176 = scalar_select %p175, %s14, 1
      %s177 = scalar_lea.vmem %s2, %s176
      %p178 = pneg %p87
      %p179 = pneg %p84
      %p180 = pneg %p113
      %p181 = pneg %p110
      %p182 = scmp.lt.s32.totalorder %s14, 1
      %s183 = scalar_select %p182, %s14, 1
      %s184 = smul.addr %s183, 8
      %s185 = smul.addr %s184, 2
      %s186 = scalar_lea.vmem %s3, %s185
      %p187 = scmp.lt.s32.totalorder %s14, 1
      %s188 = scalar_select %p187, %s14, 1
      %s189 = smul.addr %s188, 24
      %s190 = smul.addr %s189, 2
      %s191 = scalar_lea.vmem %s0, %s190
      %p192 = scmp.lt.s32.totalorder %s14, 1
      %s193 = scalar_select %p192, %s14, 1
      %s194 = smul.addr %s193, 12
      %s195 = smul.addr %s194, 8
      %s196 = scalar_lea.vmem %s1, %s195
      %p197 = scmp.lt.s32.totalorder %s14, 1
      %s198 = scalar_select %p197, %s14, 1
      %s199 = scalar_lea.vmem %s2, %s198
      %p200 = scmp.lt.s32.totalorder %s14, 1
      %s201 = scalar_select %p200, %s14, 1
      %s202 = smul.addr %s201, 8
      %s203 = smul.addr %s202, 2
      %s204 = scalar_lea.vmem %s3, %s203
      %v205 = vld [vmem:[%s196] sm:$0xff]
      %v206 = vld [vmem:[%s196 + $0x8] sm:$0xff]
      %v207 = vld [vmem:[%s196 + $0x10] sm:$0xff]
      %v208 = vld [vmem:[%s196 + $0x18] sm:$0xff]
      %s209 = scalar_lea.vmem %s196, 32
      %v210 = vld [vmem:[%s209] sm:$0xff]
      %v211 = vld [vmem:[%s209 + $0x8] sm:$0xff]
      %v212 = vld [vmem:[%s209 + $0x10] sm:$0xff]
      %v213 = vld [vmem:[%s209 + $0x18] sm:$0xff]
      %s214 = scalar_lea.vmem %s196, 64
      %v215 = vld [vmem:[%s214] sm:$0xff]
      %v216 = vld [vmem:[%s214 + $0x8] sm:$0xff]
      %v217 = vld [vmem:[%s214 + $0x10] sm:$0xff]
      %v218 = vld [vmem:[%s214 + $0x18] sm:$0xff]
      %v219 = vld [vmem:[%s199] sm:$0x1]
      %p220 = scmp.eq.s32.totalorder %s14, 0
      %s221 = scalar_select %p220, 0, 7
      %s222 = smul.u32 %s221, 2
      %s223 = scalar_lea.vmem %s191, %s222
      %v224 = vld [vmem:[%s223] sm:$0x3]
      %s225 = sadd.s32 %s222, 16
      %s226 = scalar_lea.vmem %s191, %s225
      %v227 = vld [vmem:[%s226] sm:$0x3]
      %s228 = sadd.s32 %s222, 32
      %s229 = scalar_lea.vmem %s191, %s228
      %v230 = vld [vmem:[%s229] sm:$0x3]
      %vm231 = vcmask 261120
      %v233 = vsel %vm231, 0.0, 0
      %235 = vmatprep.subr.mxu0 0.0
      %236 = vmatpush1.msra.mxu0 %v205
      %237 = vmatprep.subr.mxu0 0.0
      %238 = vmatpush1.msra.mxu0 %v206
      %239 = vmatprep.subr.mxu0 0.0
      %240 = vmatpush1.msra.mxu0 %v207
      %241 = vmatprep.subr.mxu0 0.0
      %242 = vmatpush1.msra.mxu0 %v208
      %243 = vmatprep.subr.mxu0 0.0
      %244 = vmatpush1.msra.mxu0 0.0
      %245 = vmatprep.subr.mxu0 0.0
      %246 = vmatpush1.msra.mxu0 0.0
      %247 = vmatprep.subr.mxu0 0.0
      %248 = vmatpush1.msra.mxu0 0.0
      %249 = vmatprep.subr.mxu0 0.0
      %250 = vmatpush1.msra.mxu0 0.0
      %251 = vmatprep.subr.mxu0 0.0
      %252 = vmatpush1.msra.mxu0 0.0
      %253 = vmatprep.subr.mxu0 0.0
      %254 = vmatpush1.msra.mxu0 0.0
      %255 = vmatprep.subr.mxu0 0.0
      %256 = vmatpush1.msra.mxu0 0.0
      %257 = vmatprep.subr.mxu0 0.0
      %258 = vmatpush1.msra.mxu0 0.0
      %259 = vmatprep.subr.mxu0 0.0
      %260 = vmatpush1.msra.mxu0 0.0
      %261 = vmatprep.subr.mxu0 0.0
      %262 = vmatpush1.msra.mxu0 0.0
      %263 = vmatprep.subr.mxu0 0.0
      %264 = vmatpush1.msra.mxu0 0.0
      %265 = vmatprep.subr.mxu0 0.0
      %266 = vmatpush1.msra.mxu0 0.0
      %267 = vmatprep.subr.mxu0 0.0
      %268 = vmatpush1.msra.mxu0 0.0
      %269 = vmatprep.subr.mxu0 0.0
      %270 = vmatpush1.msra.mxu0 0.0
      %271 = vmatprep.subr.mxu0 0.0
      %272 = vmatpush1.msra.mxu0 0.0
      %273 = vmatprep.subr.mxu0 0.0
      %274 = vmatpush1.msra.mxu0 0.0
      %275 = vmatprep.subr.mxu0 0.0
      %276 = vmatpush1.msra.mxu0 0.0
      %277 = vmatprep.subr.mxu0 0.0
      %278 = vmatpush1.msra.mxu0 0.0
      %279 = vmatprep.subr.mxu0 0.0
      %280 = vmatpush1.msra.mxu0 0.0
      %281 = vmatprep.subr.mxu0 0.0
      %282 = vmatpush1.msra.mxu0 0.0
      %283 = vmatprep.subr.mxu0 0.0
      %284 = vmatpush1.msra.mxu0 0.0
      %285 = vmatprep.subr.mxu0 0.0
      %286 = vmatpush1.msra.mxu0 0.0
      %287 = vmatprep.subr.mxu0 0.0
      %288 = vmatpush1.msra.mxu0 0.0
      %289 = vmatprep.subr.mxu0 0.0
      %290 = vmatpush1.msra.mxu0 0.0
      %291 = vmatprep.subr.mxu0 0.0
      %292 = vmatpush1.msra.mxu0 0.0
      %293 = vmatprep.subr.mxu0 0.0
      %294 = vmatpush1.msra.mxu0 0.0
      %295 = vmatprep.subr.mxu0 0.0
      %296 = vmatpush1.msra.mxu0 0.0
      %297 = vmatprep.subr.mxu0 0.0
      %298 = vmatpush1.msra.mxu0 0.0
      %299 = vmatprep.mubr.f32.mxu0 0.0
      %300 = vmatmul.mubr.f32.gmra.mrb[0].mxu0 %v233
      %v301 = vpop.f32.mrb[0].mxu0
      %v302 = vadd.f32 0.0, %v301
      %v303 = vpop.f32.mrb[0].mxu0
      %304 = vdwg.mxu0
      %305 = vmatprep.subr.mxu0 0.0
      %306 = vmatpush1.msra.mxu0 %v210
      %307 = vmatprep.subr.mxu0 0.0
      %308 = vmatpush1.msra.mxu0 %v211
      %309 = vmatprep.subr.mxu0 0.0
      %310 = vmatpush1.msra.mxu0 %v212
      %311 = vmatprep.subr.mxu0 0.0
      %312 = vmatpush1.msra.mxu0 %v213
      %313 = vmatprep.subr.mxu0 0.0
      %314 = vmatpush1.msra.mxu0 0.0
      %315 = vmatprep.subr.mxu0 0.0
      %316 = vmatpush1.msra.mxu0 0.0
      %317 = vmatprep.subr.mxu0 0.0
      %318 = vmatpush1.msra.mxu0 0.0
      %319 = vmatprep.subr.mxu0 0.0
      %320 = vmatpush1.msra.mxu0 0.0
      %321 = vmatprep.subr.mxu0 0.0
      %322 = vmatpush1.msra.mxu0 0.0
      %323 = vmatprep.subr.mxu0 0.0
      %324 = vmatpush1.msra.mxu0 0.0
      %325 = vmatprep.subr.mxu0 0.0
      %326 = vmatpush1.msra.mxu0 0.0
      %327 = vmatprep.subr.mxu0 0.0
      %328 = vmatpush1.msra.mxu0 0.0
      %329 = vmatprep.subr.mxu0 0.0
      %330 = vmatpush1.msra.mxu0 0.0
      %331 = vmatprep.subr.mxu0 0.0
      %332 = vmatpush1.msra.mxu0 0.0
      %333 = vmatprep.subr.mxu0 0.0
      %334 = vmatpush1.msra.mxu0 0.0
      %335 = vmatprep.subr.mxu0 0.0
      %336 = vmatpush1.msra.mxu0 0.0
      %337 = vmatprep.subr.mxu0 0.0
      %338 = vmatpush1.msra.mxu0 0.0
      %339 = vmatprep.subr.mxu0 0.0
      %340 = vmatpush1.msra.mxu0 0.0
      %341 = vmatprep.subr.mxu0 0.0
      %342 = vmatpush1.msra.mxu0 0.0
      %343 = vmatprep.subr.mxu0 0.0
      %344 = vmatpush1.msra.mxu0 0.0
      %345 = vmatprep.subr.mxu0 0.0
      %346 = vmatpush1.msra.mxu0 0.0
      %347 = vmatprep.subr.mxu0 0.0
      %348 = vmatpush1.msra.mxu0 0.0
      %349 = vmatprep.subr.mxu0 0.0
      %350 = vmatpush1.msra.mxu0 0.0
      %351 = vmatprep.subr.mxu0 0.0
      %352 = vmatpush1.msra.mxu0 0.0
      %353 = vmatprep.subr.mxu0 0.0
      %354 = vmatpush1.msra.mxu0 0.0
      %355 = vmatprep.subr.mxu0 0.0
      %356 = vmatpush1.msra.mxu0 0.0
      %357 = vmatprep.subr.mxu0 0.0
      %358 = vmatpush1.msra.mxu0 0.0
      %359 = vmatprep.subr.mxu0 0.0
      %360 = vmatpush1.msra.mxu0 0.0
      %361 = vmatprep.subr.mxu0 0.0
      %362 = vmatpush1.msra.mxu0 0.0
      %363 = vmatprep.subr.mxu0 0.0
      %364 = vmatpush1.msra.mxu0 0.0
      %365 = vmatprep.subr.mxu0 0.0
      %366 = vmatpush1.msra.mxu0 0.0
      %367 = vmatprep.subr.mxu0 0.0
      %368 = vmatpush1.msra.mxu0 0.0
      %369 = vmatprep.mubr.f32.mxu0 0.0
      %370 = vmatmul.mubr.f32.gmra.mrb[0].mxu0 %v233
      %v371 = vpop.f32.mrb[0].mxu0
      %v372 = vadd.f32 0.0, %v371
      %v373 = vpop.f32.mrb[0].mxu0
      %374 = vdwg.mxu0
      %v376 = vlaneseq
      %v377 = vshrl.u32 %v376, 7
      %v378 = vsub.s32 0, %v377
      %v379 = vrot.slane %v219, %v378
      %381 = vmatprep.subr.mxu0 0.0
      %382 = vmatpush1.msra.mxu0 %v215
      %383 = vmatprep.subr.mxu0 0.0
      %384 = vmatpush1.msra.mxu0 %v216
      %385 = vmatprep.subr.mxu0 0.0
      %386 = vmatpush1.msra.mxu0 %v217
      %387 = vmatprep.subr.mxu0 0.0
      %388 = vmatpush1.msra.mxu0 %v218
      %389 = vmatprep.subr.mxu0 0.0
      %390 = vmatpush1.msra.mxu0 0.0
      %391 = vmatprep.subr.mxu0 0.0
      %392 = vmatpush1.msra.mxu0 0.0
      %393 = vmatprep.subr.mxu0 0.0
      %394 = vmatpush1.msra.mxu0 0.0
      %395 = vmatprep.subr.mxu0 0.0
      %396 = vmatpush1.msra.mxu0 0.0
      %397 = vmatprep.subr.mxu0 0.0
      %398 = vmatpush1.msra.mxu0 0.0
      %399 = vmatprep.subr.mxu0 0.0
      %400 = vmatpush1.msra.mxu0 0.0
      %401 = vmatprep.subr.mxu0 0.0
      %402 = vmatpush1.msra.mxu0 0.0
      %403 = vmatprep.subr.mxu0 0.0
      %404 = vmatpush1.msra.mxu0 0.0
      %405 = vmatprep.subr.mxu0 0.0
      %406 = vmatpush1.msra.mxu0 0.0
      %407 = vmatprep.subr.mxu0 0.0
      %408 = vmatpush1.msra.mxu0 0.0
      %409 = vmatprep.subr.mxu0 0.0
      %410 = vmatpush1.msra.mxu0 0.0
      %411 = vmatprep.subr.mxu0 0.0
      %412 = vmatpush1.msra.mxu0 0.0
      %413 = vmatprep.subr.mxu0 0.0
      %414 = vmatpush1.msra.mxu0 0.0
      %415 = vmatprep.subr.mxu0 0.0
      %416 = vmatpush1.msra.mxu0 0.0
      %417 = vmatprep.subr.mxu0 0.0
      %418 = vmatpush1.msra.mxu0 0.0
      %419 = vmatprep.subr.mxu0 0.0
      %420 = vmatpush1.msra.mxu0 0.0
      %421 = vmatprep.subr.mxu0 0.0
      %422 = vmatpush1.msra.mxu0 0.0
      %423 = vmatprep.subr.mxu0 0.0
      %424 = vmatpush1.msra.mxu0 0.0
      %425 = vmatprep.subr.mxu0 0.0
      %426 = vmatpush1.msra.mxu0 0.0
      %427 = vmatprep.subr.mxu0 0.0
      %428 = vmatpush1.msra.mxu0 0.0
      %429 = vmatprep.subr.mxu0 0.0
      %430 = vmatpush1.msra.mxu0 0.0
      %431 = vmatprep.subr.mxu0 0.0
      %432 = vmatpush1.msra.mxu0 0.0
      %433 = vmatprep.subr.mxu0 0.0
      %434 = vmatpush1.msra.mxu0 0.0
      %435 = vmatprep.subr.mxu0 0.0
      %436 = vmatpush1.msra.mxu0 0.0
      %437 = vmatprep.subr.mxu0 0.0
      %438 = vmatpush1.msra.mxu0 0.0
      %439 = vmatprep.subr.mxu0 0.0
      %440 = vmatpush1.msra.mxu0 0.0
      %441 = vmatprep.subr.mxu0 0.0
      %442 = vmatpush1.msra.mxu0 0.0
      %443 = vmatprep.subr.mxu0 0.0
      %444 = vmatpush1.msra.mxu0 0.0
      %445 = vmatprep.mubr.f32.mxu0 0.0
      %446 = vmatmul.mubr.f32.gmra.mrb[0].mxu0 %v233
      %v447 = vpop.f32.mrb[0].mxu0
      %v448 = vadd.f32 %v379, %v447
      %v449 = vpop.f32.mrb[0].mxu0
      %450 = vdwg.mxu0
      %v451 = vadd.f32 %v224, %v302
      %v452 = vxor.u32 %v451, 2147483648
      %v453 = vmul.f32 %v452, 1.442695
      %v454 = vpow.pop %v453
      %v455 = vadd.f32 %v454, 1.0
      %v456 = vrcp.pop %v455
      %v457 = vmul.f32 1.0, %v456
      %v458 = vadd.f32 %v227, %v372
      %v459 = vxor.u32 %v458, 2147483648
      %v460 = vmul.f32 %v459, 1.442695
      %v461 = vpow.pop %v460
      %v462 = vadd.f32 %v461, 1.0
      %v463 = vrcp.pop %v462
      %v464 = vmul.f32 1.0, %v463
      %v465 = vmul.f32 %v457, %v448
      %v466 = vadd.f32 %v230, %v465
      %v467 = vtanh.pop %v466
      %v468 = vsub.f32 1.0, %v464
      %v469 = vmul.f32 %v468, %v467
      %v470 = vmul.f32 %v464, 0.0
      %v471 = vadd.f32 %v469, %v470
      %s472 = scalar_lea.vmem %s204, %s222
      %vm473 = vcmask 254976
      %474 = vst.msk [vmem:[%s472] sm:$0x3] %vm473, %v471
      %s475 = scalar_select %p220, 1, 6
      %s476 = smul.u32 %s475, 2
      %s477 = scalar_lea.vmem %s191, %s476
      %v478 = vld [vmem:[%s477] sm:$0x3]
      %s479 = sadd.s32 %s476, 16
      %s480 = scalar_lea.vmem %s191, %s479
      %v481 = vld [vmem:[%s480] sm:$0x3]
      %s482 = sadd.s32 %s476, 32
      %s483 = scalar_lea.vmem %s191, %s482
      %v484 = vld [vmem:[%s483] sm:$0x3]
      %v486 = vsel %vm231, %v471, 0
      %488 = vmatprep.subr.mxu0 0.0
      %489 = vmatpush1.msra.mxu0 %v205
      %490 = vmatprep.subr.mxu0 0.0
      %491 = vmatpush1.msra.mxu0 %v206
      %492 = vmatprep.subr.mxu0 0.0
      %493 = vmatpush1.msra.mxu0 %v207
      %494 = vmatprep.subr.mxu0 0.0
      %495 = vmatpush1.msra.mxu0 %v208
      %496 = vmatprep.subr.mxu0 0.0
      %497 = vmatpush1.msra.mxu0 0.0
      %498 = vmatprep.subr.mxu0 0.0
      %499 = vmatpush1.msra.mxu0 0.0
      %500 = vmatprep.subr.mxu0 0.0
      %501 = vmatpush1.msra.mxu0 0.0
      %502 = vmatprep.subr.mxu0 0.0
      %503 = vmatpush1.msra.mxu0 0.0
      %504 = vmatprep.subr.mxu0 0.0
      %505 = vmatpush1.msra.mxu0 0.0
      %506 = vmatprep.subr.mxu0 0.0
      %507 = vmatpush1.msra.mxu0 0.0
      %508 = vmatprep.subr.mxu0 0.0
      %509 = vmatpush1.msra.mxu0 0.0
      %510 = vmatprep.subr.mxu0 0.0
      %511 = vmatpush1.msra.mxu0 0.0
      %512 = vmatprep.subr.mxu0 0.0
      %513 = vmatpush1.msra.mxu0 0.0
      %514 = vmatprep.subr.mxu0 0.0
      %515 = vmatpush1.msra.mxu0 0.0
      %516 = vmatprep.subr.mxu0 0.0
      %517 = vmatpush1.msra.mxu0 0.0
      %518 = vmatprep.subr.mxu0 0.0
      %519 = vmatpush1.msra.mxu0 0.0
      %520 = vmatprep.subr.mxu0 0.0
      %521 = vmatpush1.msra.mxu0 0.0
      %522 = vmatprep.subr.mxu0 0.0
      %523 = vmatpush1.msra.mxu0 0.0
      %524 = vmatprep.subr.mxu0 0.0
      %525 = vmatpush1.msra.mxu0 0.0
      %526 = vmatprep.subr.mxu0 0.0
      %527 = vmatpush1.msra.mxu0 0.0
      %528 = vmatprep.subr.mxu0 0.0
      %529 = vmatpush1.msra.mxu0 0.0
      %530 = vmatprep.subr.mxu0 0.0
      %531 = vmatpush1.msra.mxu0 0.0
      %532 = vmatprep.subr.mxu0 0.0
      %533 = vmatpush1.msra.mxu0 0.0
      %534 = vmatprep.subr.mxu0 0.0
      %535 = vmatpush1.msra.mxu0 0.0
      %536 = vmatprep.subr.mxu0 0.0
      %537 = vmatpush1.msra.mxu0 0.0
      %538 = vmatprep.subr.mxu0 0.0
      %539 = vmatpush1.msra.mxu0 0.0
      %540 = vmatprep.subr.mxu0 0.0
      %541 = vmatpush1.msra.mxu0 0.0
      %542 = vmatprep.subr.mxu0 0.0
      %543 = vmatpush1.msra.mxu0 0.0
      %544 = vmatprep.subr.mxu0 0.0
      %545 = vmatpush1.msra.mxu0 0.0
      %546 = vmatprep.subr.mxu0 0.0
      %547 = vmatpush1.msra.mxu0 0.0
      %548 = vmatprep.subr.mxu0 0.0
      %549 = vmatpush1.msra.mxu0 0.0
      %550 = vmatprep.subr.mxu0 0.0
      %551 = vmatpush1.msra.mxu0 0.0
      %552 = vmatprep.mubr.f32.mxu0 0.0
      %553 = vmatmul.mubr.f32.gmra.mrb[0].mxu0 %v486
      %v554 = vpop.f32.mrb[0].mxu0
      %v555 = vadd.f32 0.0, %v554
      %v556 = vpop.f32.mrb[0].mxu0
      %557 = vdwg.mxu0
      %558 = vmatprep.subr.mxu0 0.0
      %559 = vmatpush1.msra.mxu0 %v210
      %560 = vmatprep.subr.mxu0 0.0
      %561 = vmatpush1.msra.mxu0 %v211
      %562 = vmatprep.subr.mxu0 0.0
      %563 = vmatpush1.msra.mxu0 %v212
      %564 = vmatprep.subr.mxu0 0.0
      %565 = vmatpush1.msra.mxu0 %v213
      %566 = vmatprep.subr.mxu0 0.0
      %567 = vmatpush1.msra.mxu0 0.0
      %568 = vmatprep.subr.mxu0 0.0
      %569 = vmatpush1.msra.mxu0 0.0
      %570 = vmatprep.subr.mxu0 0.0
      %571 = vmatpush1.msra.mxu0 0.0
      %572 = vmatprep.subr.mxu0 0.0
      %573 = vmatpush1.msra.mxu0 0.0
      %574 = vmatprep.subr.mxu0 0.0
      %575 = vmatpush1.msra.mxu0 0.0
      %576 = vmatprep.subr.mxu0 0.0
      %577 = vmatpush1.msra.mxu0 0.0
      %578 = vmatprep.subr.mxu0 0.0
      %579 = vmatpush1.msra.mxu0 0.0
      %580 = vmatprep.subr.mxu0 0.0
      %581 = vmatpush1.msra.mxu0 0.0
      %582 = vmatprep.subr.mxu0 0.0
      %583 = vmatpush1.msra.mxu0 0.0
      %584 = vmatprep.subr.mxu0 0.0
      %585 = vmatpush1.msra.mxu0 0.0
      %586 = vmatprep.subr.mxu0 0.0
      %587 = vmatpush1.msra.mxu0 0.0
      %588 = vmatprep.subr.mxu0 0.0
      %589 = vmatpush1.msra.mxu0 0.0
      %590 = vmatprep.subr.mxu0 0.0
      %591 = vmatpush1.msra.mxu0 0.0
      %592 = vmatprep.subr.mxu0 0.0
      %593 = vmatpush1.msra.mxu0 0.0
      %594 = vmatprep.subr.mxu0 0.0
      %595 = vmatpush1.msra.mxu0 0.0
      %596 = vmatprep.subr.mxu0 0.0
      %597 = vmatpush1.msra.mxu0 0.0
      %598 = vmatprep.subr.mxu0 0.0
      %599 = vmatpush1.msra.mxu0 0.0
      %600 = vmatprep.subr.mxu0 0.0
      %601 = vmatpush1.msra.mxu0 0.0
      %602 = vmatprep.subr.mxu0 0.0
      %603 = vmatpush1.msra.mxu0 0.0
      %604 = vmatprep.subr.mxu0 0.0
      %605 = vmatpush1.msra.mxu0 0.0
      %606 = vmatprep.subr.mxu0 0.0
      %607 = vmatpush1.msra.mxu0 0.0
      %608 = vmatprep.subr.mxu0 0.0
      %609 = vmatpush1.msra.mxu0 0.0
      %610 = vmatprep.subr.mxu0 0.0
      %611 = vmatpush1.msra.mxu0 0.0
      %612 = vmatprep.subr.mxu0 0.0
      %613 = vmatpush1.msra.mxu0 0.0
      %614 = vmatprep.subr.mxu0 0.0
      %615 = vmatpush1.msra.mxu0 0.0
      %616 = vmatprep.subr.mxu0 0.0
      %617 = vmatpush1.msra.mxu0 0.0
      %618 = vmatprep.subr.mxu0 0.0
      %619 = vmatpush1.msra.mxu0 0.0
      %620 = vmatprep.subr.mxu0 0.0
      %621 = vmatpush1.msra.mxu0 0.0
      %622 = vmatprep.mubr.f32.mxu0 0.0
      %623 = vmatmul.mubr.f32.gmra.mrb[0].mxu0 %v486
      %v624 = vpop.f32.mrb[0].mxu0
      %v625 = vadd.f32 0.0, %v624
      %v626 = vpop.f32.mrb[0].mxu0
      %627 = vdwg.mxu0
      %628 = vmatprep.subr.mxu0 0.0
      %629 = vmatpush1.msra.mxu0 %v215
      %630 = vmatprep.subr.mxu0 0.0
      %631 = vmatpush1.msra.mxu0 %v216
      %632 = vmatprep.subr.mxu0 0.0
      %633 = vmatpush1.msra.mxu0 %v217
      %634 = vmatprep.subr.mxu0 0.0
      %635 = vmatpush1.msra.mxu0 %v218
      %636 = vmatprep.subr.mxu0 0.0
      %637 = vmatpush1.msra.mxu0 0.0
      %638 = vmatprep.subr.mxu0 0.0
      %639 = vmatpush1.msra.mxu0 0.0
      %640 = vmatprep.subr.mxu0 0.0
      %641 = vmatpush1.msra.mxu0 0.0
      %642 = vmatprep.subr.mxu0 0.0
      %643 = vmatpush1.msra.mxu0 0.0
      %644 = vmatprep.subr.mxu0 0.0
      %645 = vmatpush1.msra.mxu0 0.0
      %646 = vmatprep.subr.mxu0 0.0
      %647 = vmatpush1.msra.mxu0 0.0
      %648 = vmatprep.subr.mxu0 0.0
      %649 = vmatpush1.msra.mxu0 0.0
      %650 = vmatprep.subr.mxu0 0.0
      %651 = vmatpush1.msra.mxu0 0.0
      %652 = vmatprep.subr.mxu0 0.0
      %653 = vmatpush1.msra.mxu0 0.0
      %654 = vmatprep.subr.mxu0 0.0
      %655 = vmatpush1.msra.mxu0 0.0
      %656 = vmatprep.subr.mxu0 0.0
      %657 = vmatpush1.msra.mxu0 0.0
      %658 = vmatprep.subr.mxu0 0.0
      %659 = vmatpush1.msra.mxu0 0.0
      %660 = vmatprep.subr.mxu0 0.0
      %661 = vmatpush1.msra.mxu0 0.0
      %662 = vmatprep.subr.mxu0 0.0
      %663 = vmatpush1.msra.mxu0 0.0
      %664 = vmatprep.subr.mxu0 0.0
      %665 = vmatpush1.msra.mxu0 0.0
      %666 = vmatprep.subr.mxu0 0.0
      %667 = vmatpush1.msra.mxu0 0.0
      %668 = vmatprep.subr.mxu0 0.0
      %669 = vmatpush1.msra.mxu0 0.0
      %670 = vmatprep.subr.mxu0 0.0
      %671 = vmatpush1.msra.mxu0 0.0
      %672 = vmatprep.subr.mxu0 0.0
      %673 = vmatpush1.msra.mxu0 0.0
      %674 = vmatprep.subr.mxu0 0.0
      %675 = vmatpush1.msra.mxu0 0.0
      %676 = vmatprep.subr.mxu0 0.0
      %677 = vmatpush1.msra.mxu0 0.0
      %678 = vmatprep.subr.mxu0 0.0
      %679 = vmatpush1.msra.mxu0 0.0
      %680 = vmatprep.subr.mxu0 0.0
      %681 = vmatpush1.msra.mxu0 0.0
      %682 = vmatprep.subr.mxu0 0.0
      %683 = vmatpush1.msra.mxu0 0.0
      %684 = vmatprep.subr.mxu0 0.0
      %685 = vmatpush1.msra.mxu0 0.0
      %686 = vmatprep.subr.mxu0 0.0
      %687 = vmatpush1.msra.mxu0 0.0
      %688 = vmatprep.subr.mxu0 0.0
      %689 = vmatpush1.msra.mxu0 0.0
      %690 = vmatprep.subr.mxu0 0.0
      %691 = vmatpush1.msra.mxu0 0.0
      %692 = vmatprep.mubr.f32.mxu0 0.0
      %693 = vmatmul.mubr.f32.gmra.mrb[0].mxu0 %v486
      %v694 = vpop.f32.mrb[0].mxu0
      %v695 = vadd.f32 %v379, %v694
      %v696 = vpop.f32.mrb[0].mxu0
      %697 = vdwg.mxu0
      %v698 = vadd.f32 %v478, %v555
      %v699 = vxor.u32 %v698, 2147483648
      %v700 = vmul.f32 %v699, 1.442695
      %v701 = vpow.pop %v700
      %v702 = vadd.f32 %v701, 1.0
      %v703 = vrcp.pop %v702
      %v704 = vmul.f32 1.0, %v703
      %v705 = vadd.f32 %v481, %v625
      %v706 = vxor.u32 %v705, 2147483648
      %v707 = vmul.f32 %v706, 1.442695
      %v708 = vpow.pop %v707
      %v709 = vadd.f32 %v708, 1.0
      %v710 = vrcp.pop %v709
      %v711 = vmul.f32 1.0, %v710
      %v712 = vmul.f32 %v704, %v695
      %v713 = vadd.f32 %v484, %v712
      %v714 = vtanh.pop %v713
      %v715 = vsub.f32 1.0, %v711
      %v716 = vmul.f32 %v715, %v714
      %v717 = vmul.f32 %v711, %v471
      %v718 = vadd.f32 %v716, %v717
      %s719 = scalar_lea.vmem %s204, %s476
      %720 = vst.msk [vmem:[%s719] sm:$0x3] %vm473, %v718
      %s721 = scalar_select %p220, 2, 5
      %s722 = smul.u32 %s721, 2
      %s723 = scalar_lea.vmem %s191, %s722
      %v724 = vld [vmem:[%s723] sm:$0x3]
      %s725 = sadd.s32 %s722, 16
      %s726 = scalar_lea.vmem %s191, %s725
      %v727 = vld [vmem:[%s726] sm:$0x3]
      %s728 = sadd.s32 %s722, 32
      %s729 = scalar_lea.vmem %s191, %s728
      %v730 = vld [vmem:[%s729] sm:$0x3]
      %v732 = vsel %vm231, %v718, 0
      %734 = vmatprep.subr.mxu0 0.0
      %735 = vmatpush1.msra.mxu0 %v205
      %736 = vmatprep.subr.mxu0 0.0
      %737 = vmatpush1.msra.mxu0 %v206
      %738 = vmatprep.subr.mxu0 0.0
      %739 = vmatpush1.msra.mxu0 %v207
      %740 = vmatprep.subr.mxu0 0.0
      %741 = vmatpush1.msra.mxu0 %v208
      %742 = vmatprep.subr.mxu0 0.0
      %743 = vmatpush1.msra.mxu0 0.0
      %744 = vmatprep.subr.mxu0 0.0
      %745 = vmatpush1.msra.mxu0 0.0
      %746 = vmatprep.subr.mxu0 0.0
      %747 = vmatpush1.msra.mxu0 0.0
      %748 = vmatprep.subr.mxu0 0.0
      %749 = vmatpush1.msra.mxu0 0.0
      %750 = vmatprep.subr.mxu0 0.0
      %751 = vmatpush1.msra.mxu0 0.0
      %752 = vmatprep.subr.mxu0 0.0
      %753 = vmatpush1.msra.mxu0 0.0
      %754 = vmatprep.subr.mxu0 0.0
      %755 = vmatpush1.msra.mxu0 0.0
      %756 = vmatprep.subr.mxu0 0.0
      %757 = vmatpush1.msra.mxu0 0.0
      %758 = vmatprep.subr.mxu0 0.0
      %759 = vmatpush1.msra.mxu0 0.0
      %760 = vmatprep.subr.mxu0 0.0
      %761 = vmatpush1.msra.mxu0 0.0
      %762 = vmatprep.subr.mxu0 0.0
      %763 = vmatpush1.msra.mxu0 0.0
      %764 = vmatprep.subr.mxu0 0.0
      %765 = vmatpush1.msra.mxu0 0.0
      %766 = vmatprep.subr.mxu0 0.0
      %767 = vmatpush1.msra.mxu0 0.0
      %768 = vmatprep.subr.mxu0 0.0
      %769 = vmatpush1.msra.mxu0 0.0
      %770 = vmatprep.subr.mxu0 0.0
      %771 = vmatpush1.msra.mxu0 0.0
      %772 = vmatprep.subr.mxu0 0.0
      %773 = vmatpush1.msra.mxu0 0.0
      %774 = vmatprep.subr.mxu0 0.0
      %775 = vmatpush1.msra.mxu0 0.0
      %776 = vmatprep.subr.mxu0 0.0
      %777 = vmatpush1.msra.mxu0 0.0
      %778 = vmatprep.subr.mxu0 0.0
      %779 = vmatpush1.msra.mxu0 0.0
      %780 = vmatprep.subr.mxu0 0.0
      %781 = vmatpush1.msra.mxu0 0.0
      %782 = vmatprep.subr.mxu0 0.0
      %783 = vmatpush1.msra.mxu0 0.0
      %784 = vmatprep.subr.mxu0 0.0
      %785 = vmatpush1.msra.mxu0 0.0
      %786 = vmatprep.subr.mxu0 0.0
      %787 = vmatpush1.msra.mxu0 0.0
      %788 = vmatprep.subr.mxu0 0.0
      %789 = vmatpush1.msra.mxu0 0.0
      %790 = vmatprep.subr.mxu0 0.0
      %791 = vmatpush1.msra.mxu0 0.0
      %792 = vmatprep.subr.mxu0 0.0
      %793 = vmatpush1.msra.mxu0 0.0
      %794 = vmatprep.subr.mxu0 0.0
      %795 = vmatpush1.msra.mxu0 0.0
      %796 = vmatprep.subr.mxu0 0.0
      %797 = vmatpush1.msra.mxu0 0.0
      %798 = vmatprep.mubr.f32.mxu0 0.0
      %799 = vmatmul.mubr.f32.gmra.mrb[0].mxu0 %v732
      %v800 = vpop.f32.mrb[0].mxu0
      %v801 = vadd.f32 0.0, %v800
      %v802 = vpop.f32.mrb[0].mxu0
      %803 = vdwg.mxu0
      %804 = vmatprep.subr.mxu0 0.0
      %805 = vmatpush1.msra.mxu0 %v210
      %806 = vmatprep.subr.mxu0 0.0
      %807 = vmatpush1.msra.mxu0 %v211
      %808 = vmatprep.subr.mxu0 0.0
      %809 = vmatpush1.msra.mxu0 %v212
      %810 = vmatprep.subr.mxu0 0.0
      %811 = vmatpush1.msra.mxu0 %v213
      %812 = vmatprep.subr.mxu0 0.0
      %813 = vmatpush1.msra.mxu0 0.0
      %814 = vmatprep.subr.mxu0 0.0
      %815 = vmatpush1.msra.mxu0 0.0
      %816 = vmatprep.subr.mxu0 0.0
      %817 = vmatpush1.msra.mxu0 0.0
      %818 = vmatprep.subr.mxu0 0.0
      %819 = vmatpush1.msra.mxu0 0.0
      %820 = vmatprep.subr.mxu0 0.0
      %821 = vmatpush1.msra.mxu0 0.0
      %822 = vmatprep.subr.mxu0 0.0
      %823 = vmatpush1.msra.mxu0 0.0
      %824 = vmatprep.subr.mxu0 0.0
      %825 = vmatpush1.msra.mxu0 0.0
      %826 = vmatprep.subr.mxu0 0.0
      %827 = vmatpush1.msra.mxu0 0.0
      %828 = vmatprep.subr.mxu0 0.0
      %829 = vmatpush1.msra.mxu0 0.0
      %830 = vmatprep.subr.mxu0 0.0
      %831 = vmatpush1.msra.mxu0 0.0
      %832 = vmatprep.subr.mxu0 0.0
      %833 = vmatpush1.msra.mxu0 0.0
      %834 = vmatprep.subr.mxu0 0.0
      %835 = vmatpush1.msra.mxu0 0.0
      %836 = vmatprep.subr.mxu0 0.0
      %837 = vmatpush1.msra.mxu0 0.0
      %838 = vmatprep.subr.mxu0 0.0
      %839 = vmatpush1.msra.mxu0 0.0
      %840 = vmatprep.subr.mxu0 0.0
      %841 = vmatpush1.msra.mxu0 0.0
      %842 = vmatprep.subr.mxu0 0.0
      %843 = vmatpush1.msra.mxu0 0.0
      %844 = vmatprep.subr.mxu0 0.0
      %845 = vmatpush1.msra.mxu0 0.0
      %846 = vmatprep.subr.mxu0 0.0
      %847 = vmatpush1.msra.mxu0 0.0
      %848 = vmatprep.subr.mxu0 0.0
      %849 = vmatpush1.msra.mxu0 0.0
      %850 = vmatprep.subr.mxu0 0.0
      %851 = vmatpush1.msra.mxu0 0.0
      %852 = vmatprep.subr.mxu0 0.0
      %853 = vmatpush1.msra.mxu0 0.0
      %854 = vmatprep.subr.mxu0 0.0
      %855 = vmatpush1.msra.mxu0 0.0
      %856 = vmatprep.subr.mxu0 0.0
      %857 = vmatpush1.msra.mxu0 0.0
      %858 = vmatprep.subr.mxu0 0.0
      %859 = vmatpush1.msra.mxu0 0.0
      %860 = vmatprep.subr.mxu0 0.0
      %861 = vmatpush1.msra.mxu0 0.0
      %862 = vmatprep.subr.mxu0 0.0
      %863 = vmatpush1.msra.mxu0 0.0
      %864 = vmatprep.subr.mxu0 0.0
      %865 = vmatpush1.msra.mxu0 0.0
      %866 = vmatprep.subr.mxu0 0.0
      %867 = vmatpush1.msra.mxu0 0.0
      %868 = vmatprep.mubr.f32.mxu0 0.0
      %869 = vmatmul.mubr.f32.gmra.mrb[0].mxu0 %v732
      %v870 = vpop.f32.mrb[0].mxu0
      %v871 = vadd.f32 0.0, %v870
      %v872 = vpop.f32.mrb[0].mxu0
      %873 = vdwg.mxu0
      %874 = vmatprep.subr.mxu0 0.0
      %875 = vmatpush1.msra.mxu0 %v215
      %876 = vmatprep.subr.mxu0 0.0
      %877 = vmatpush1.msra.mxu0 %v216
      %878 = vmatprep.subr.mxu0 0.0
      %879 = vmatpush1.msra.mxu0 %v217
      %880 = vmatprep.subr.mxu0 0.0
      %881 = vmatpush1.msra.mxu0 %v218
      %882 = vmatprep.subr.mxu0 0.0
      %883 = vmatpush1.msra.mxu0 0.0
      %884 = vmatprep.subr.mxu0 0.0
      %885 = vmatpush1.msra.mxu0 0.0
      %886 = vmatprep.subr.mxu0 0.0
      %887 = vmatpush1.msra.mxu0 0.0
      %888 = vmatprep.subr.mxu0 0.0
      %889 = vmatpush1.msra.mxu0 0.0
      %890 = vmatprep.subr.mxu0 0.0
      %891 = vmatpush1.msra.mxu0 0.0
      %892 = vmatprep.subr.mxu0 0.0
      %893 = vmatpush1.msra.mxu0 0.0
      %894 = vmatprep.subr.mxu0 0.0
      %895 = vmatpush1.msra.mxu0 0.0
      %896 = vmatprep.subr.mxu0 0.0
      %897 = vmatpush1.msra.mxu0 0.0
      %898 = vmatprep.subr.mxu0 0.0
      %899 = vmatpush1.msra.mxu0 0.0
      %900 = vmatprep.subr.mxu0 0.0
      %901 = vmatpush1.msra.mxu0 0.0
      %902 = vmatprep.subr.mxu0 0.0
      %903 = vmatpush1.msra.mxu0 0.0
      %904 = vmatprep.subr.mxu0 0.0
      %905 = vmatpush1.msra.mxu0 0.0
      %906 = vmatprep.subr.mxu0 0.0
      %907 = vmatpush1.msra.mxu0 0.0
      %908 = vmatprep.subr.mxu0 0.0
      %909 = vmatpush1.msra.mxu0 0.0
      %910 = vmatprep.subr.mxu0 0.0
      %911 = vmatpush1.msra.mxu0 0.0
      %912 = vmatprep.subr.mxu0 0.0
      %913 = vmatpush1.msra.mxu0 0.0
      %914 = vmatprep.subr.mxu0 0.0
      %915 = vmatpush1.msra.mxu0 0.0
      %916 = vmatprep.subr.mxu0 0.0
      %917 = vmatpush1.msra.mxu0 0.0
      %918 = vmatprep.subr.mxu0 0.0
      %919 = vmatpush1.msra.mxu0 0.0
      %920 = vmatprep.subr.mxu0 0.0
      %921 = vmatpush1.msra.mxu0 0.0
      %922 = vmatprep.subr.mxu0 0.0
      %923 = vmatpush1.msra.mxu0 0.0
      %924 = vmatprep.subr.mxu0 0.0
      %925 = vmatpush1.msra.mxu0 0.0
      %926 = vmatprep.subr.mxu0 0.0
      %927 = vmatpush1.msra.mxu0 0.0
      %928 = vmatprep.subr.mxu0 0.0
      %929 = vmatpush1.msra.mxu0 0.0
      %930 = vmatprep.subr.mxu0 0.0
      %931 = vmatpush1.msra.mxu0 0.0
      %932 = vmatprep.subr.mxu0 0.0
      %933 = vmatpush1.msra.mxu0 0.0
      %934 = vmatprep.subr.mxu0 0.0
      %935 = vmatpush1.msra.mxu0 0.0
      %936 = vmatprep.subr.mxu0 0.0
      %937 = vmatpush1.msra.mxu0 0.0
      %938 = vmatprep.mubr.f32.mxu0 0.0
      %939 = vmatmul.mubr.f32.gmra.mrb[0].mxu0 %v732
      %v940 = vpop.f32.mrb[0].mxu0
      %v941 = vadd.f32 %v379, %v940
      %v942 = vpop.f32.mrb[0].mxu0
      %943 = vdwg.mxu0
      %v944 = vadd.f32 %v724, %v801
      %v945 = vxor.u32 %v944, 2147483648
      %v946 = vmul.f32 %v945, 1.442695
      %v947 = vpow.pop %v946
      %v948 = vadd.f32 %v947, 1.0
      %v949 = vrcp.pop %v948
      %v950 = vmul.f32 1.0, %v949
      %v951 = vadd.f32 %v727, %v871
      %v952 = vxor.u32 %v951, 2147483648
      %v953 = vmul.f32 %v952, 1.442695
      %v954 = vpow.pop %v953
      %v955 = vadd.f32 %v954, 1.0
      %v956 = vrcp.pop %v955
      %v957 = vmul.f32 1.0, %v956
      %v958 = vmul.f32 %v950, %v941
      %v959 = vadd.f32 %v730, %v958
      %v960 = vtanh.pop %v959
      %v961 = vsub.f32 1.0, %v957
      %v962 = vmul.f32 %v961, %v960
      %v963 = vmul.f32 %v957, %v718
      %v964 = vadd.f32 %v962, %v963
      %s965 = scalar_lea.vmem %s204, %s722
      %966 = vst.msk [vmem:[%s965] sm:$0x3] %vm473, %v964
      %s967 = scalar_select %p220, 3, 4
      %s968 = smul.u32 %s967, 2
      %s969 = scalar_lea.vmem %s191, %s968
      %v970 = vld [vmem:[%s969] sm:$0x3]
      %s971 = sadd.s32 %s968, 16
      %s972 = scalar_lea.vmem %s191, %s971
      %v973 = vld [vmem:[%s972] sm:$0x3]
      %s974 = sadd.s32 %s968, 32
      %s975 = scalar_lea.vmem %s191, %s974
      %v976 = vld [vmem:[%s975] sm:$0x3]
      %v978 = vsel %vm231, %v964, 0
      %980 = vmatprep.subr.mxu0 0.0
      %981 = vmatpush1.msra.mxu0 %v205
      %982 = vmatprep.subr.mxu0 0.0
      %983 = vmatpush1.msra.mxu0 %v206
      %984 = vmatprep.subr.mxu0 0.0
      %985 = vmatpush1.msra.mxu0 %v207
      %986 = vmatprep.subr.mxu0 0.0
      %987 = vmatpush1.msra.mxu0 %v208
      %988 = vmatprep.subr.mxu0 0.0
      %989 = vmatpush1.msra.mxu0 0.0
      %990 = vmatprep.subr.mxu0 0.0
      %991 = vmatpush1.msra.mxu0 0.0
      %992 = vmatprep.subr.mxu0 0.0
      %993 = vmatpush1.msra.mxu0 0.0
      %994 = vmatprep.subr.mxu0 0.0
      %995 = vmatpush1.msra.mxu0 0.0
      %996 = vmatprep.subr.mxu0 0.0
      %997 = vmatpush1.msra.mxu0 0.0
      %998 = vmatprep.subr.mxu0 0.0
      %999 = vmatpush1.msra.mxu0 0.0
      %1000 = vmatprep.subr.mxu0 0.0
      %1001 = vmatpush1.msra.mxu0 0.0
      %1002 = vmatprep.subr.mxu0 0.0
      %1003 = vmatpush1.msra.mxu0 0.0
      %1004 = vmatprep.subr.mxu0 0.0
      %1005 = vmatpush1.msra.mxu0 0.0
      %1006 = vmatprep.subr.mxu0 0.0
      %1007 = vmatpush1.msra.mxu0 0.0
      %1008 = vmatprep.subr.mxu0 0.0
      %1009 = vmatpush1.msra.mxu0 0.0
      %1010 = vmatprep.subr.mxu0 0.0
      %1011 = vmatpush1.msra.mxu0 0.0
      %1012 = vmatprep.subr.mxu0 0.0
      %1013 = vmatpush1.msra.mxu0 0.0
      %1014 = vmatprep.subr.mxu0 0.0
      %1015 = vmatpush1.msra.mxu0 0.0
      %1016 = vmatprep.subr.mxu0 0.0
      %1017 = vmatpush1.msra.mxu0 0.0
      %1018 = vmatprep.subr.mxu0 0.0
      %1019 = vmatpush1.msra.mxu0 0.0
      %1020 = vmatprep.subr.mxu0 0.0
      %1021 = vmatpush1.msra.mxu0 0.0
      %1022 = vmatprep.subr.mxu0 0.0
      %1023 = vmatpush1.msra.mxu0 0.0
      %1024 = vmatprep.subr.mxu0 0.0
      %1025 = vmatpush1.msra.mxu0 0.0
      %1026 = vmatprep.subr.mxu0 0.0
      %1027 = vmatpush1.msra.mxu0 0.0
      %1028 = vmatprep.subr.mxu0 0.0
      %1029 = vmatpush1.msra.mxu0 0.0
      %1030 = vmatprep.subr.mxu0 0.0
      %1031 = vmatpush1.msra.mxu0 0.0
      %1032 = vmatprep.subr.mxu0 0.0
      %1033 = vmatpush1.msra.mxu0 0.0
      %1034 = vmatprep.subr.mxu0 0.0
      %1035 = vmatpush1.msra.mxu0 0.0
      %1036 = vmatprep.subr.mxu0 0.0
      %1037 = vmatpush1.msra.mxu0 0.0
      %1038 = vmatprep.subr.mxu0 0.0
      %1039 = vmatpush1.msra.mxu0 0.0
      %1040 = vmatprep.subr.mxu0 0.0
      %1041 = vmatpush1.msra.mxu0 0.0
      %1042 = vmatprep.subr.mxu0 0.0
      %1043 = vmatpush1.msra.mxu0 0.0
      %1044 = vmatprep.mubr.f32.mxu0 0.0
      %1045 = vmatmul.mubr.f32.gmra.mrb[0].mxu0 %v978
      %v1046 = vpop.f32.mrb[0].mxu0
      %v1047 = vadd.f32 0.0, %v1046
      %v1048 = vpop.f32.mrb[0].mxu0
      %1049 = vdwg.mxu0
      %1050 = vmatprep.subr.mxu0 0.0
      %1051 = vmatpush1.msra.mxu0 %v210
      %1052 = vmatprep.subr.mxu0 0.0
      %1053 = vmatpush1.msra.mxu0 %v211
      %1054 = vmatprep.subr.mxu0 0.0
      %1055 = vmatpush1.msra.mxu0 %v212
      %1056 = vmatprep.subr.mxu0 0.0
      %1057 = vmatpush1.msra.mxu0 %v213
      %1058 = vmatprep.subr.mxu0 0.0
      %1059 = vmatpush1.msra.mxu0 0.0
      %1060 = vmatprep.subr.mxu0 0.0
      %1061 = vmatpush1.msra.mxu0 0.0
      %1062 = vmatprep.subr.mxu0 0.0
      %1063 = vmatpush1.msra.mxu0 0.0
      %1064 = vmatprep.subr.mxu0 0.0
      %1065 = vmatpush1.msra.mxu0 0.0
      %1066 = vmatprep.subr.mxu0 0.0
      %1067 = vmatpush1.msra.mxu0 0.0
      %1068 = vmatprep.subr.mxu0 0.0
      %1069 = vmatpush1.msra.mxu0 0.0
      %1070 = vmatprep.subr.mxu0 0.0
      %1071 = vmatpush1.msra.mxu0 0.0
      %1072 = vmatprep.subr.mxu0 0.0
      %1073 = vmatpush1.msra.mxu0 0.0
      %1074 = vmatprep.subr.mxu0 0.0
      %1075 = vmatpush1.msra.mxu0 0.0
      %1076 = vmatprep.subr.mxu0 0.0
      %1077 = vmatpush1.msra.mxu0 0.0
      %1078 = vmatprep.subr.mxu0 0.0
      %1079 = vmatpush1.msra.mxu0 0.0
      %1080 = vmatprep.subr.mxu0 0.0
      %1081 = vmatpush1.msra.mxu0 0.0
      %1082 = vmatprep.subr.mxu0 0.0
      %1083 = vmatpush1.msra.mxu0 0.0
      %1084 = vmatprep.subr.mxu0 0.0
      %1085 = vmatpush1.msra.mxu0 0.0
      %1086 = vmatprep.subr.mxu0 0.0
      %1087 = vmatpush1.msra.mxu0 0.0
      %1088 = vmatprep.subr.mxu0 0.0
      %1089 = vmatpush1.msra.mxu0 0.0
      %1090 = vmatprep.subr.mxu0 0.0
      %1091 = vmatpush1.msra.mxu0 0.0
      %1092 = vmatprep.subr.mxu0 0.0
      %1093 = vmatpush1.msra.mxu0 0.0
      %1094 = vmatprep.subr.mxu0 0.0
      %1095 = vmatpush1.msra.mxu0 0.0
      %1096 = vmatprep.subr.mxu0 0.0
      %1097 = vmatpush1.msra.mxu0 0.0
      %1098 = vmatprep.subr.mxu0 0.0
      %1099 = vmatpush1.msra.mxu0 0.0
      %1100 = vmatprep.subr.mxu0 0.0
      %1101 = vmatpush1.msra.mxu0 0.0
      %1102 = vmatprep.subr.mxu0 0.0
      %1103 = vmatpush1.msra.mxu0 0.0
      %1104 = vmatprep.subr.mxu0 0.0
      %1105 = vmatpush1.msra.mxu0 0.0
      %1106 = vmatprep.subr.mxu0 0.0
      %1107 = vmatpush1.msra.mxu0 0.0
      %1108 = vmatprep.subr.mxu0 0.0
      %1109 = vmatpush1.msra.mxu0 0.0
      %1110 = vmatprep.subr.mxu0 0.0
      %1111 = vmatpush1.msra.mxu0 0.0
      %1112 = vmatprep.subr.mxu0 0.0
      %1113 = vmatpush1.msra.mxu0 0.0
      %1114 = vmatprep.mubr.f32.mxu0 0.0
      %1115 = vmatmul.mubr.f32.gmra.mrb[0].mxu0 %v978
      %v1116 = vpop.f32.mrb[0].mxu0
      %v1117 = vadd.f32 0.0, %v1116
      %v1118 = vpop.f32.mrb[0].mxu0
      %1119 = vdwg.mxu0
      %1120 = vmatprep.subr.mxu0 0.0
      %1121 = vmatpush1.msra.mxu0 %v215
      %1122 = vmatprep.subr.mxu0 0.0
      %1123 = vmatpush1.msra.mxu0 %v216
      %1124 = vmatprep.subr.mxu0 0.0
      %1125 = vmatpush1.msra.mxu0 %v217
      %1126 = vmatprep.subr.mxu0 0.0
      %1127 = vmatpush1.msra.mxu0 %v218
      %1128 = vmatprep.subr.mxu0 0.0
      %1129 = vmatpush1.msra.mxu0 0.0
      %1130 = vmatprep.subr.mxu0 0.0
      %1131 = vmatpush1.msra.mxu0 0.0
      %1132 = vmatprep.subr.mxu0 0.0
      %1133 = vmatpush1.msra.mxu0 0.0
      %1134 = vmatprep.subr.mxu0 0.0
      %1135 = vmatpush1.msra.mxu0 0.0
      %1136 = vmatprep.subr.mxu0 0.0
      %1137 = vmatpush1.msra.mxu0 0.0
      %1138 = vmatprep.subr.mxu0 0.0
      %1139 = vmatpush1.msra.mxu0 0.0
      %1140 = vmatprep.subr.mxu0 0.0
      %1141 = vmatpush1.msra.mxu0 0.0
      %1142 = vmatprep.subr.mxu0 0.0
      %1143 = vmatpush1.msra.mxu0 0.0
      %1144 = vmatprep.subr.mxu0 0.0
      %1145 = vmatpush1.msra.mxu0 0.0
      %1146 = vmatprep.subr.mxu0 0.0
      %1147 = vmatpush1.msra.mxu0 0.0
      %1148 = vmatprep.subr.mxu0 0.0
      %1149 = vmatpush1.msra.mxu0 0.0
      %1150 = vmatprep.subr.mxu0 0.0
      %1151 = vmatpush1.msra.mxu0 0.0
      %1152 = vmatprep.subr.mxu0 0.0
      %1153 = vmatpush1.msra.mxu0 0.0
      %1154 = vmatprep.subr.mxu0 0.0
      %1155 = vmatpush1.msra.mxu0 0.0
      %1156 = vmatprep.subr.mxu0 0.0
      %1157 = vmatpush1.msra.mxu0 0.0
      %1158 = vmatprep.subr.mxu0 0.0
      %1159 = vmatpush1.msra.mxu0 0.0
      %1160 = vmatprep.subr.mxu0 0.0
      %1161 = vmatpush1.msra.mxu0 0.0
      %1162 = vmatprep.subr.mxu0 0.0
      %1163 = vmatpush1.msra.mxu0 0.0
      %1164 = vmatprep.subr.mxu0 0.0
      %1165 = vmatpush1.msra.mxu0 0.0
      %1166 = vmatprep.subr.mxu0 0.0
      %1167 = vmatpush1.msra.mxu0 0.0
      %1168 = vmatprep.subr.mxu0 0.0
      %1169 = vmatpush1.msra.mxu0 0.0
      %1170 = vmatprep.subr.mxu0 0.0
      %1171 = vmatpush1.msra.mxu0 0.0
      %1172 = vmatprep.subr.mxu0 0.0
      %1173 = vmatpush1.msra.mxu0 0.0
      %1174 = vmatprep.subr.mxu0 0.0
      %1175 = vmatpush1.msra.mxu0 0.0
      %1176 = vmatprep.subr.mxu0 0.0
      %1177 = vmatpush1.msra.mxu0 0.0
      %1178 = vmatprep.subr.mxu0 0.0
      %1179 = vmatpush1.msra.mxu0 0.0
      %1180 = vmatprep.subr.mxu0 0.0
      %1181 = vmatpush1.msra.mxu0 0.0
      %1182 = vmatprep.subr.mxu0 0.0
      %1183 = vmatpush1.msra.mxu0 0.0
      %1184 = vmatprep.mubr.f32.mxu0 0.0
      %1185 = vmatmul.mubr.f32.gmra.mrb[0].mxu0 %v978
      %v1186 = vpop.f32.mrb[0].mxu0
      %v1187 = vadd.f32 %v379, %v1186
      %v1188 = vpop.f32.mrb[0].mxu0
      %1189 = vdwg.mxu0
      %v1190 = vadd.f32 %v970, %v1047
      %v1191 = vxor.u32 %v1190, 2147483648
      %v1192 = vmul.f32 %v1191, 1.442695
      %v1193 = vpow.pop %v1192
      %v1194 = vadd.f32 %v1193, 1.0
      %v1195 = vrcp.pop %v1194
      %v1196 = vmul.f32 1.0, %v1195
      %v1197 = vadd.f32 %v973, %v1117
      %v1198 = vxor.u32 %v1197, 2147483648
      %v1199 = vmul.f32 %v1198, 1.442695
      %v1200 = vpow.pop %v1199
      %v1201 = vadd.f32 %v1200, 1.0
      %v1202 = vrcp.pop %v1201
      %v1203 = vmul.f32 1.0, %v1202
      %v1204 = vmul.f32 %v1196, %v1187
      %v1205 = vadd.f32 %v976, %v1204
      %v1206 = vtanh.pop %v1205
      %v1207 = vsub.f32 1.0, %v1203
      %v1208 = vmul.f32 %v1207, %v1206
      %v1209 = vmul.f32 %v1203, %v964
      %v1210 = vadd.f32 %v1208, %v1209
      %s1211 = scalar_lea.vmem %s204, %s968
      %1212 = vst.msk [vmem:[%s1211] sm:$0x3] %vm473, %v1210
      %s1213 = scalar_select %p220, 4, 3
      %s1214 = smul.u32 %s1213, 2
      %s1215 = scalar_lea.vmem %s191, %s1214
      %v1216 = vld [vmem:[%s1215] sm:$0x3]
      %s1217 = sadd.s32 %s1214, 16
      %s1218 = scalar_lea.vmem %s191, %s1217
      %v1219 = vld [vmem:[%s1218] sm:$0x3]
      %s1220 = sadd.s32 %s1214, 32
      %s1221 = scalar_lea.vmem %s191, %s1220
      %v1222 = vld [vmem:[%s1221] sm:$0x3]
      %v1224 = vsel %vm231, %v1210, 0
      %1226 = vmatprep.subr.mxu0 0.0
      %1227 = vmatpush1.msra.mxu0 %v205
      %1228 = vmatprep.subr.mxu0 0.0
      %1229 = vmatpush1.msra.mxu0 %v206
      %1230 = vmatprep.subr.mxu0 0.0
      %1231 = vmatpush1.msra.mxu0 %v207
      %1232 = vmatprep.subr.mxu0 0.0
      %1233 = vmatpush1.msra.mxu0 %v208
      %1234 = vmatprep.subr.mxu0 0.0
      %1235 = vmatpush1.msra.mxu0 0.0
      %1236 = vmatprep.subr.mxu0 0.0
      %1237 = vmatpush1.msra.mxu0 0.0
      %1238 = vmatprep.subr.mxu0 0.0
      %1239 = vmatpush1.msra.mxu0 0.0
      %1240 = vmatprep.subr.mxu0 0.0
      %1241 = vmatpush1.msra.mxu0 0.0
      %1242 = vmatprep.subr.mxu0 0.0
      %1243 = vmatpush1.msra.mxu0 0.0
      %1244 = vmatprep.subr.mxu0 0.0
      %1245 = vmatpush1.msra.mxu0 0.0
      %1246 = vmatprep.subr.mxu0 0.0
      %1247 = vmatpush1.msra.mxu0 0.0
      %1248 = vmatprep.subr.mxu0 0.0
      %1249 = vmatpush1.msra.mxu0 0.0
      %1250 = vmatprep.subr.mxu0 0.0
      %1251 = vmatpush1.msra.mxu0 0.0
      %1252 = vmatprep.subr.mxu0 0.0
      %1253 = vmatpush1.msra.mxu0 0.0
      %1254 = vmatprep.subr.mxu0 0.0
      %1255 = vmatpush1.msra.mxu0 0.0
      %1256 = vmatprep.subr.mxu0 0.0
      %1257 = vmatpush1.msra.mxu0 0.0
      %1258 = vmatprep.subr.mxu0 0.0
      %1259 = vmatpush1.msra.mxu0 0.0
      %1260 = vmatprep.subr.mxu0 0.0
      %1261 = vmatpush1.msra.mxu0 0.0
      %1262 = vmatprep.subr.mxu0 0.0
      %1263 = vmatpush1.msra.mxu0 0.0
      %1264 = vmatprep.subr.mxu0 0.0
      %1265 = vmatpush1.msra.mxu0 0.0
      %1266 = vmatprep.subr.mxu0 0.0
      %1267 = vmatpush1.msra.mxu0 0.0
      %1268 = vmatprep.subr.mxu0 0.0
      %1269 = vmatpush1.msra.mxu0 0.0
      %1270 = vmatprep.subr.mxu0 0.0
      %1271 = vmatpush1.msra.mxu0 0.0
      %1272 = vmatprep.subr.mxu0 0.0
      %1273 = vmatpush1.msra.mxu0 0.0
      %1274 = vmatprep.subr.mxu0 0.0
      %1275 = vmatpush1.msra.mxu0 0.0
      %1276 = vmatprep.subr.mxu0 0.0
      %1277 = vmatpush1.msra.mxu0 0.0
      %1278 = vmatprep.subr.mxu0 0.0
      %1279 = vmatpush1.msra.mxu0 0.0
      %1280 = vmatprep.subr.mxu0 0.0
      %1281 = vmatpush1.msra.mxu0 0.0
      %1282 = vmatprep.subr.mxu0 0.0
      %1283 = vmatpush1.msra.mxu0 0.0
      %1284 = vmatprep.subr.mxu0 0.0
      %1285 = vmatpush1.msra.mxu0 0.0
      %1286 = vmatprep.subr.mxu0 0.0
      %1287 = vmatpush1.msra.mxu0 0.0
      %1288 = vmatprep.subr.mxu0 0.0
      %1289 = vmatpush1.msra.mxu0 0.0
      %1290 = vmatprep.mubr.f32.mxu0 0.0
      %1291 = vmatmul.mubr.f32.gmra.mrb[0].mxu0 %v1224
      %v1292 = vpop.f32.mrb[0].mxu0
      %v1293 = vadd.f32 0.0, %v1292
      %v1294 = vpop.f32.mrb[0].mxu0
      %1295 = vdwg.mxu0
      %1296 = vmatprep.subr.mxu0 0.0
      %1297 = vmatpush1.msra.mxu0 %v210
      %1298 = vmatprep.subr.mxu0 0.0
      %1299 = vmatpush1.msra.mxu0 %v211
      %1300 = vmatprep.subr.mxu0 0.0
      %1301 = vmatpush1.msra.mxu0 %v212
      %1302 = vmatprep.subr.mxu0 0.0
      %1303 = vmatpush1.msra.mxu0 %v213
      %1304 = vmatprep.subr.mxu0 0.0
      %1305 = vmatpush1.msra.mxu0 0.0
      %1306 = vmatprep.subr.mxu0 0.0
      %1307 = vmatpush1.msra.mxu0 0.0
      %1308 = vmatprep.subr.mxu0 0.0
      %1309 = vmatpush1.msra.mxu0 0.0
      %1310 = vmatprep.subr.mxu0 0.0
      %1311 = vmatpush1.msra.mxu0 0.0
      %1312 = vmatprep.subr.mxu0 0.0
      %1313 = vmatpush1.msra.mxu0 0.0
      %1314 = vmatprep.subr.mxu0 0.0
      %1315 = vmatpush1.msra.mxu0 0.0
      %1316 = vmatprep.subr.mxu0 0.0
      %1317 = vmatpush1.msra.mxu0 0.0
      %1318 = vmatprep.subr.mxu0 0.0
      %1319 = vmatpush1.msra.mxu0 0.0
      %1320 = vmatprep.subr.mxu0 0.0
      %1321 = vmatpush1.msra.mxu0 0.0
      %1322 = vmatprep.subr.mxu0 0.0
      %1323 = vmatpush1.msra.mxu0 0.0
      %1324 = vmatprep.subr.mxu0 0.0
      %1325 = vmatpush1.msra.mxu0 0.0
      %1326 = vmatprep.subr.mxu0 0.0
      %1327 = vmatpush1.msra.mxu0 0.0
      %1328 = vmatprep.subr.mxu0 0.0
      %1329 = vmatpush1.msra.mxu0 0.0
      %1330 = vmatprep.subr.mxu0 0.0
      %1331 = vmatpush1.msra.mxu0 0.0
      %1332 = vmatprep.subr.mxu0 0.0
      %1333 = vmatpush1.msra.mxu0 0.0
      %1334 = vmatprep.subr.mxu0 0.0
      %1335 = vmatpush1.msra.mxu0 0.0
      %1336 = vmatprep.subr.mxu0 0.0
      %1337 = vmatpush1.msra.mxu0 0.0
      %1338 = vmatprep.subr.mxu0 0.0
      %1339 = vmatpush1.msra.mxu0 0.0
      %1340 = vmatprep.subr.mxu0 0.0
      %1341 = vmatpush1.msra.mxu0 0.0
      %1342 = vmatprep.subr.mxu0 0.0
      %1343 = vmatpush1.msra.mxu0 0.0
      %1344 = vmatprep.subr.mxu0 0.0
      %1345 = vmatpush1.msra.mxu0 0.0
      %1346 = vmatprep.subr.mxu0 0.0
      %1347 = vmatpush1.msra.mxu0 0.0
      %1348 = vmatprep.subr.mxu0 0.0
      %1349 = vmatpush1.msra.mxu0 0.0
      %1350 = vmatprep.subr.mxu0 0.0
      %1351 = vmatpush1.msra.mxu0 0.0
      %1352 = vmatprep.subr.mxu0 0.0
      %1353 = vmatpush1.msra.mxu0 0.0
      %1354 = vmatprep.subr.mxu0 0.0
      %1355 = vmatpush1.msra.mxu0 0.0
      %1356 = vmatprep.subr.mxu0 0.0
      %1357 = vmatpush1.msra.mxu0 0.0
      %1358 = vmatprep.subr.mxu0 0.0
      %1359 = vmatpush1.msra.mxu0 0.0
      %1360 = vmatprep.mubr.f32.mxu0 0.0
      %1361 = vmatmul.mubr.f32.gmra.mrb[0].mxu0 %v1224
      %v1362 = vpop.f32.mrb[0].mxu0
      %v1363 = vadd.f32 0.0, %v1362
      %v1364 = vpop.f32.mrb[0].mxu0
      %1365 = vdwg.mxu0
      %1366 = vmatprep.subr.mxu0 0.0
      %1367 = vmatpush1.msra.mxu0 %v215
      %1368 = vmatprep.subr.mxu0 0.0
      %1369 = vmatpush1.msra.mxu0 %v216
      %1370 = vmatprep.subr.mxu0 0.0
      %1371 = vmatpush1.msra.mxu0 %v217
      %1372 = vmatprep.subr.mxu0 0.0
      %1373 = vmatpush1.msra.mxu0 %v218
      %1374 = vmatprep.subr.mxu0 0.0
      %1375 = vmatpush1.msra.mxu0 0.0
      %1376 = vmatprep.subr.mxu0 0.0
      %1377 = vmatpush1.msra.mxu0 0.0
      %1378 = vmatprep.subr.mxu0 0.0
      %1379 = vmatpush1.msra.mxu0 0.0
      %1380 = vmatprep.subr.mxu0 0.0
      %1381 = vmatpush1.msra.mxu0 0.0
      %1382 = vmatprep.subr.mxu0 0.0
      %1383 = vmatpush1.msra.mxu0 0.0
      %1384 = vmatprep.subr.mxu0 0.0
      %1385 = vmatpush1.msra.mxu0 0.0
      %1386 = vmatprep.subr.mxu0 0.0
      %1387 = vmatpush1.msra.mxu0 0.0
      %1388 = vmatprep.subr.mxu0 0.0
      %1389 = vmatpush1.msra.mxu0 0.0
      %1390 = vmatprep.subr.mxu0 0.0
      %1391 = vmatpush1.msra.mxu0 0.0
      %1392 = vmatprep.subr.mxu0 0.0
      %1393 = vmatpush1.msra.mxu0 0.0
      %1394 = vmatprep.subr.mxu0 0.0
      %1395 = vmatpush1.msra.mxu0 0.0
      %1396 = vmatprep.subr.mxu0 0.0
      %1397 = vmatpush1.msra.mxu0 0.0
      %1398 = vmatprep.subr.mxu0 0.0
      %1399 = vmatpush1.msra.mxu0 0.0
      %1400 = vmatprep.subr.mxu0 0.0
      %1401 = vmatpush1.msra.mxu0 0.0
      %1402 = vmatprep.subr.mxu0 0.0
      %1403 = vmatpush1.msra.mxu0 0.0
      %1404 = vmatprep.subr.mxu0 0.0
      %1405 = vmatpush1.msra.mxu0 0.0
      %1406 = vmatprep.subr.mxu0 0.0
      %1407 = vmatpush1.msra.mxu0 0.0
      %1408 = vmatprep.subr.mxu0 0.0
      %1409 = vmatpush1.msra.mxu0 0.0
      %1410 = vmatprep.subr.mxu0 0.0
      %1411 = vmatpush1.msra.mxu0 0.0
      %1412 = vmatprep.subr.mxu0 0.0
      %1413 = vmatpush1.msra.mxu0 0.0
      %1414 = vmatprep.subr.mxu0 0.0
      %1415 = vmatpush1.msra.mxu0 0.0
      %1416 = vmatprep.subr.mxu0 0.0
      %1417 = vmatpush1.msra.mxu0 0.0
      %1418 = vmatprep.subr.mxu0 0.0
      %1419 = vmatpush1.msra.mxu0 0.0
      %1420 = vmatprep.subr.mxu0 0.0
      %1421 = vmatpush1.msra.mxu0 0.0
      %1422 = vmatprep.subr.mxu0 0.0
      %1423 = vmatpush1.msra.mxu0 0.0
      %1424 = vmatprep.subr.mxu0 0.0
      %1425 = vmatpush1.msra.mxu0 0.0
      %1426 = vmatprep.subr.mxu0 0.0
      %1427 = vmatpush1.msra.mxu0 0.0
      %1428 = vmatprep.subr.mxu0 0.0
      %1429 = vmatpush1.msra.mxu0 0.0
      %1430 = vmatprep.mubr.f32.mxu0 0.0
      %1431 = vmatmul.mubr.f32.gmra.mrb[0].mxu0 %v1224
      %v1432 = vpop.f32.mrb[0].mxu0
      %v1433 = vadd.f32 %v379, %v1432
      %v1434 = vpop.f32.mrb[0].mxu0
      %1435 = vdwg.mxu0
      %v1436 = vadd.f32 %v1216, %v1293
      %v1437 = vxor.u32 %v1436, 2147483648
      %v1438 = vmul.f32 %v1437, 1.442695
      %v1439 = vpow.pop %v1438
      %v1440 = vadd.f32 %v1439, 1.0
      %v1441 = vrcp.pop %v1440
      %v1442 = vmul.f32 1.0, %v1441
      %v1443 = vadd.f32 %v1219, %v1363
      %v1444 = vxor.u32 %v1443, 2147483648
      %v1445 = vmul.f32 %v1444, 1.442695
      %v1446 = vpow.pop %v1445
      %v1447 = vadd.f32 %v1446, 1.0
      %v1448 = vrcp.pop %v1447
      %v1449 = vmul.f32 1.0, %v1448
      %v1450 = vmul.f32 %v1442, %v1433
      %v1451 = vadd.f32 %v1222, %v1450
      %v1452 = vtanh.pop %v1451
      %v1453 = vsub.f32 1.0, %v1449
      %v1454 = vmul.f32 %v1453, %v1452
      %v1455 = vmul.f32 %v1449, %v1210
      %v1456 = vadd.f32 %v1454, %v1455
      %s1457 = scalar_lea.vmem %s204, %s1214
      %1458 = vst.msk [vmem:[%s1457] sm:$0x3] %vm473, %v1456
      %s1459 = scalar_select %p220, 5, 2
      %s1460 = smul.u32 %s1459, 2
      %s1461 = scalar_lea.vmem %s191, %s1460
      %v1462 = vld [vmem:[%s1461] sm:$0x3]
      %s1463 = sadd.s32 %s1460, 16
      %s1464 = scalar_lea.vmem %s191, %s1463
      %v1465 = vld [vmem:[%s1464] sm:$0x3]
      %s1466 = sadd.s32 %s1460, 32
      %s1467 = scalar_lea.vmem %s191, %s1466
      %v1468 = vld [vmem:[%s1467] sm:$0x3]
      %v1470 = vsel %vm231, %v1456, 0
      %1472 = vmatprep.subr.mxu0 0.0
      %1473 = vmatpush1.msra.mxu0 %v205
      %1474 = vmatprep.subr.mxu0 0.0
      %1475 = vmatpush1.msra.mxu0 %v206
      %1476 = vmatprep.subr.mxu0 0.0
      %1477 = vmatpush1.msra.mxu0 %v207
      %1478 = vmatprep.subr.mxu0 0.0
      %1479 = vmatpush1.msra.mxu0 %v208
      %1480 = vmatprep.subr.mxu0 0.0
      %1481 = vmatpush1.msra.mxu0 0.0
      %1482 = vmatprep.subr.mxu0 0.0
      %1483 = vmatpush1.msra.mxu0 0.0
      %1484 = vmatprep.subr.mxu0 0.0
      %1485 = vmatpush1.msra.mxu0 0.0
      %1486 = vmatprep.subr.mxu0 0.0
      %1487 = vmatpush1.msra.mxu0 0.0
      %1488 = vmatprep.subr.mxu0 0.0
      %1489 = vmatpush1.msra.mxu0 0.0
      %1490 = vmatprep.subr.mxu0 0.0
      %1491 = vmatpush1.msra.mxu0 0.0
      %1492 = vmatprep.subr.mxu0 0.0
      %1493 = vmatpush1.msra.mxu0 0.0
      %1494 = vmatprep.subr.mxu0 0.0
      %1495 = vmatpush1.msra.mxu0 0.0
      %1496 = vmatprep.subr.mxu0 0.0
      %1497 = vmatpush1.msra.mxu0 0.0
      %1498 = vmatprep.subr.mxu0 0.0
      %1499 = vmatpush1.msra.mxu0 0.0
      %1500 = vmatprep.subr.mxu0 0.0
      %1501 = vmatpush1.msra.mxu0 0.0
      %1502 = vmatprep.subr.mxu0 0.0
      %1503 = vmatpush1.msra.mxu0 0.0
      %1504 = vmatprep.subr.mxu0 0.0
      %1505 = vmatpush1.msra.mxu0 0.0
      %1506 = vmatprep.subr.mxu0 0.0
      %1507 = vmatpush1.msra.mxu0 0.0
      %1508 = vmatprep.subr.mxu0 0.0
      %1509 = vmatpush1.msra.mxu0 0.0
      %1510 = vmatprep.subr.mxu0 0.0
      %1511 = vmatpush1.msra.mxu0 0.0
      %1512 = vmatprep.subr.mxu0 0.0
      %1513 = vmatpush1.msra.mxu0 0.0
      %1514 = vmatprep.subr.mxu0 0.0
      %1515 = vmatpush1.msra.mxu0 0.0
      %1516 = vmatprep.subr.mxu0 0.0
      %1517 = vmatpush1.msra.mxu0 0.0
      %1518 = vmatprep.subr.mxu0 0.0
      %1519 = vmatpush1.msra.mxu0 0.0
      %1520 = vmatprep.subr.mxu0 0.0
      %1521 = vmatpush1.msra.mxu0 0.0
      %1522 = vmatprep.subr.mxu0 0.0
      %1523 = vmatpush1.msra.mxu0 0.0
      %1524 = vmatprep.subr.mxu0 0.0
      %1525 = vmatpush1.msra.mxu0 0.0
      %1526 = vmatprep.subr.mxu0 0.0
      %1527 = vmatpush1.msra.mxu0 0.0
      %1528 = vmatprep.subr.mxu0 0.0
      %1529 = vmatpush1.msra.mxu0 0.0
      %1530 = vmatprep.subr.mxu0 0.0
      %1531 = vmatpush1.msra.mxu0 0.0
      %1532 = vmatprep.subr.mxu0 0.0
      %1533 = vmatpush1.msra.mxu0 0.0
      %1534 = vmatprep.subr.mxu0 0.0
      %1535 = vmatpush1.msra.mxu0 0.0
      %1536 = vmatprep.mubr.f32.mxu0 0.0
      %1537 = vmatmul.mubr.f32.gmra.mrb[0].mxu0 %v1470
      %v1538 = vpop.f32.mrb[0].mxu0
      %v1539 = vadd.f32 0.0, %v1538
      %v1540 = vpop.f32.mrb[0].mxu0
      %1541 = vdwg.mxu0
      %1542 = vmatprep.subr.mxu0 0.0
      %1543 = vmatpush1.msra.mxu0 %v210
      %1544 = vmatprep.subr.mxu0 0.0
      %1545 = vmatpush1.msra.mxu0 %v211
      %1546 = vmatprep.subr.mxu0 0.0
      %1547 = vmatpush1.msra.mxu0 %v212
      %1548 = vmatprep.subr.mxu0 0.0
      %1549 = vmatpush1.msra.mxu0 %v213
      %1550 = vmatprep.subr.mxu0 0.0
      %1551 = vmatpush1.msra.mxu0 0.0
      %1552 = vmatprep.subr.mxu0 0.0
      %1553 = vmatpush1.msra.mxu0 0.0
      %1554 = vmatprep.subr.mxu0 0.0
      %1555 = vmatpush1.msra.mxu0 0.0
      %1556 = vmatprep.subr.mxu0 0.0
      %1557 = vmatpush1.msra.mxu0 0.0
      %1558 = vmatprep.subr.mxu0 0.0
      %1559 = vmatpush1.msra.mxu0 0.0
      %1560 = vmatprep.subr.mxu0 0.0
      %1561 = vmatpush1.msra.mxu0 0.0
      %1562 = vmatprep.subr.mxu0 0.0
      %1563 = vmatpush1.msra.mxu0 0.0
      %1564 = vmatprep.subr.mxu0 0.0
      %1565 = vmatpush1.msra.mxu0 0.0
      %1566 = vmatprep.subr.mxu0 0.0
      %1567 = vmatpush1.msra.mxu0 0.0
      %1568 = vmatprep.subr.mxu0 0.0
      %1569 = vmatpush1.msra.mxu0 0.0
      %1570 = vmatprep.subr.mxu0 0.0
      %1571 = vmatpush1.msra.mxu0 0.0
      %1572 = vmatprep.subr.mxu0 0.0
      %1573 = vmatpush1.msra.mxu0 0.0
      %1574 = vmatprep.subr.mxu0 0.0
      %1575 = vmatpush1.msra.mxu0 0.0
      %1576 = vmatprep.subr.mxu0 0.0
      %1577 = vmatpush1.msra.mxu0 0.0
      %1578 = vmatprep.subr.mxu0 0.0
      %1579 = vmatpush1.msra.mxu0 0.0
      %1580 = vmatprep.subr.mxu0 0.0
      %1581 = vmatpush1.msra.mxu0 0.0
      %1582 = vmatprep.subr.mxu0 0.0
      %1583 = vmatpush1.msra.mxu0 0.0
      %1584 = vmatprep.subr.mxu0 0.0
      %1585 = vmatpush1.msra.mxu0 0.0
      %1586 = vmatprep.subr.mxu0 0.0
      %1587 = vmatpush1.msra.mxu0 0.0
      %1588 = vmatprep.subr.mxu0 0.0
      %1589 = vmatpush1.msra.mxu0 0.0
      %1590 = vmatprep.subr.mxu0 0.0
      %1591 = vmatpush1.msra.mxu0 0.0
      %1592 = vmatprep.subr.mxu0 0.0
      %1593 = vmatpush1.msra.mxu0 0.0
      %1594 = vmatprep.subr.mxu0 0.0
      %1595 = vmatpush1.msra.mxu0 0.0
      %1596 = vmatprep.subr.mxu0 0.0
      %1597 = vmatpush1.msra.mxu0 0.0
      %1598 = vmatprep.subr.mxu0 0.0
      %1599 = vmatpush1.msra.mxu0 0.0
      %1600 = vmatprep.subr.mxu0 0.0
      %1601 = vmatpush1.msra.mxu0 0.0
      %1602 = vmatprep.subr.mxu0 0.0
      %1603 = vmatpush1.msra.mxu0 0.0
      %1604 = vmatprep.subr.mxu0 0.0
      %1605 = vmatpush1.msra.mxu0 0.0
      %1606 = vmatprep.mubr.f32.mxu0 0.0
      %1607 = vmatmul.mubr.f32.gmra.mrb[0].mxu0 %v1470
      %v1608 = vpop.f32.mrb[0].mxu0
      %v1609 = vadd.f32 0.0, %v1608
      %v1610 = vpop.f32.mrb[0].mxu0
      %1611 = vdwg.mxu0
      %1612 = vmatprep.subr.mxu0 0.0
      %1613 = vmatpush1.msra.mxu0 %v215
      %1614 = vmatprep.subr.mxu0 0.0
      %1615 = vmatpush1.msra.mxu0 %v216
      %1616 = vmatprep.subr.mxu0 0.0
      %1617 = vmatpush1.msra.mxu0 %v217
      %1618 = vmatprep.subr.mxu0 0.0
      %1619 = vmatpush1.msra.mxu0 %v218
      %1620 = vmatprep.subr.mxu0 0.0
      %1621 = vmatpush1.msra.mxu0 0.0
      %1622 = vmatprep.subr.mxu0 0.0
      %1623 = vmatpush1.msra.mxu0 0.0
      %1624 = vmatprep.subr.mxu0 0.0
      %1625 = vmatpush1.msra.mxu0 0.0
      %1626 = vmatprep.subr.mxu0 0.0
      %1627 = vmatpush1.msra.mxu0 0.0
      %1628 = vmatprep.subr.mxu0 0.0
      %1629 = vmatpush1.msra.mxu0 0.0
      %1630 = vmatprep.subr.mxu0 0.0
      %1631 = vmatpush1.msra.mxu0 0.0
      %1632 = vmatprep.subr.mxu0 0.0
      %1633 = vmatpush1.msra.mxu0 0.0
      %1634 = vmatprep.subr.mxu0 0.0
      %1635 = vmatpush1.msra.mxu0 0.0
      %1636 = vmatprep.subr.mxu0 0.0
      %1637 = vmatpush1.msra.mxu0 0.0
      %1638 = vmatprep.subr.mxu0 0.0
      %1639 = vmatpush1.msra.mxu0 0.0
      %1640 = vmatprep.subr.mxu0 0.0
      %1641 = vmatpush1.msra.mxu0 0.0
      %1642 = vmatprep.subr.mxu0 0.0
      %1643 = vmatpush1.msra.mxu0 0.0
      %1644 = vmatprep.subr.mxu0 0.0
      %1645 = vmatpush1.msra.mxu0 0.0
      %1646 = vmatprep.subr.mxu0 0.0
      %1647 = vmatpush1.msra.mxu0 0.0
      %1648 = vmatprep.subr.mxu0 0.0
      %1649 = vmatpush1.msra.mxu0 0.0
      %1650 = vmatprep.subr.mxu0 0.0
      %1651 = vmatpush1.msra.mxu0 0.0
      %1652 = vmatprep.subr.mxu0 0.0
      %1653 = vmatpush1.msra.mxu0 0.0
      %1654 = vmatprep.subr.mxu0 0.0
      %1655 = vmatpush1.msra.mxu0 0.0
      %1656 = vmatprep.subr.mxu0 0.0
      %1657 = vmatpush1.msra.mxu0 0.0
      %1658 = vmatprep.subr.mxu0 0.0
      %1659 = vmatpush1.msra.mxu0 0.0
      %1660 = vmatprep.subr.mxu0 0.0
      %1661 = vmatpush1.msra.mxu0 0.0
      %1662 = vmatprep.subr.mxu0 0.0
      %1663 = vmatpush1.msra.mxu0 0.0
      %1664 = vmatprep.subr.mxu0 0.0
      %1665 = vmatpush1.msra.mxu0 0.0
      %1666 = vmatprep.subr.mxu0 0.0
      %1667 = vmatpush1.msra.mxu0 0.0
      %1668 = vmatprep.subr.mxu0 0.0
      %1669 = vmatpush1.msra.mxu0 0.0
      %1670 = vmatprep.subr.mxu0 0.0
      %1671 = vmatpush1.msra.mxu0 0.0
      %1672 = vmatprep.subr.mxu0 0.0
      %1673 = vmatpush1.msra.mxu0 0.0
      %1674 = vmatprep.subr.mxu0 0.0
      %1675 = vmatpush1.msra.mxu0 0.0
      %1676 = vmatprep.mubr.f32.mxu0 0.0
      %1677 = vmatmul.mubr.f32.gmra.mrb[0].mxu0 %v1470
      %v1678 = vpop.f32.mrb[0].mxu0
      %v1679 = vadd.f32 %v379, %v1678
      %v1680 = vpop.f32.mrb[0].mxu0
      %1681 = vdwg.mxu0
      %v1682 = vadd.f32 %v1462, %v1539
      %v1683 = vxor.u32 %v1682, 2147483648
      %v1684 = vmul.f32 %v1683, 1.442695
      %v1685 = vpow.pop %v1684
      %v1686 = vadd.f32 %v1685, 1.0
      %v1687 = vrcp.pop %v1686
      %v1688 = vmul.f32 1.0, %v1687
      %v1689 = vadd.f32 %v1465, %v1609
      %v1690 = vxor.u32 %v1689, 2147483648
      %v1691 = vmul.f32 %v1690, 1.442695
      %v1692 = vpow.pop %v1691
      %v1693 = vadd.f32 %v1692, 1.0
      %v1694 = vrcp.pop %v1693
      %v1695 = vmul.f32 1.0, %v1694
      %v1696 = vmul.f32 %v1688, %v1679
      %v1697 = vadd.f32 %v1468, %v1696
      %v1698 = vtanh.pop %v1697
      %v1699 = vsub.f32 1.0, %v1695
      %v1700 = vmul.f32 %v1699, %v1698
      %v1701 = vmul.f32 %v1695, %v1456
      %v1702 = vadd.f32 %v1700, %v1701
      %s1703 = scalar_lea.vmem %s204, %s1460
      %1704 = vst.msk [vmem:[%s1703] sm:$0x3] %vm473, %v1702
      %s1705 = scalar_select %p220, 6, 1
      %s1706 = smul.u32 %s1705, 2
      %s1707 = scalar_lea.vmem %s191, %s1706
      %v1708 = vld [vmem:[%s1707] sm:$0x3]
      %s1709 = sadd.s32 %s1706, 16
      %s1710 = scalar_lea.vmem %s191, %s1709
      %v1711 = vld [vmem:[%s1710] sm:$0x3]
      %s1712 = sadd.s32 %s1706, 32
      %s1713 = scalar_lea.vmem %s191, %s1712
      %v1714 = vld [vmem:[%s1713] sm:$0x3]
      %v1716 = vsel %vm231, %v1702, 0
      %1718 = vmatprep.subr.mxu0 0.0
      %1719 = vmatpush1.msra.mxu0 %v205
      %1720 = vmatprep.subr.mxu0 0.0
      %1721 = vmatpush1.msra.mxu0 %v206
      %1722 = vmatprep.subr.mxu0 0.0
      %1723 = vmatpush1.msra.mxu0 %v207
      %1724 = vmatprep.subr.mxu0 0.0
      %1725 = vmatpush1.msra.mxu0 %v208
      %1726 = vmatprep.subr.mxu0 0.0
      %1727 = vmatpush1.msra.mxu0 0.0
      %1728 = vmatprep.subr.mxu0 0.0
      %1729 = vmatpush1.msra.mxu0 0.0
      %1730 = vmatprep.subr.mxu0 0.0
      %1731 = vmatpush1.msra.mxu0 0.0
      %1732 = vmatprep.subr.mxu0 0.0
      %1733 = vmatpush1.msra.mxu0 0.0
      %1734 = vmatprep.subr.mxu0 0.0
      %1735 = vmatpush1.msra.mxu0 0.0
      %1736 = vmatprep.subr.mxu0 0.0
      %1737 = vmatpush1.msra.mxu0 0.0
      %1738 = vmatprep.subr.mxu0 0.0
      %1739 = vmatpush1.msra.mxu0 0.0
      %1740 = vmatprep.subr.mxu0 0.0
      %1741 = vmatpush1.msra.mxu0 0.0
      %1742 = vmatprep.subr.mxu0 0.0
      %1743 = vmatpush1.msra.mxu0 0.0
      %1744 = vmatprep.subr.mxu0 0.0
      %1745 = vmatpush1.msra.mxu0 0.0
      %1746 = vmatprep.subr.mxu0 0.0
      %1747 = vmatpush1.msra.mxu0 0.0
      %1748 = vmatprep.subr.mxu0 0.0
      %1749 = vmatpush1.msra.mxu0 0.0
      %1750 = vmatprep.subr.mxu0 0.0
      %1751 = vmatpush1.msra.mxu0 0.0
      %1752 = vmatprep.subr.mxu0 0.0
      %1753 = vmatpush1.msra.mxu0 0.0
      %1754 = vmatprep.subr.mxu0 0.0
      %1755 = vmatpush1.msra.mxu0 0.0
      %1756 = vmatprep.subr.mxu0 0.0
      %1757 = vmatpush1.msra.mxu0 0.0
      %1758 = vmatprep.subr.mxu0 0.0
      %1759 = vmatpush1.msra.mxu0 0.0
      %1760 = vmatprep.subr.mxu0 0.0
      %1761 = vmatpush1.msra.mxu0 0.0
      %1762 = vmatprep.subr.mxu0 0.0
      %1763 = vmatpush1.msra.mxu0 0.0
      %1764 = vmatprep.subr.mxu0 0.0
      %1765 = vmatpush1.msra.mxu0 0.0
      %1766 = vmatprep.subr.mxu0 0.0
      %1767 = vmatpush1.msra.mxu0 0.0
      %1768 = vmatprep.subr.mxu0 0.0
      %1769 = vmatpush1.msra.mxu0 0.0
      %1770 = vmatprep.subr.mxu0 0.0
      %1771 = vmatpush1.msra.mxu0 0.0
      %1772 = vmatprep.subr.mxu0 0.0
      %1773 = vmatpush1.msra.mxu0 0.0
      %1774 = vmatprep.subr.mxu0 0.0
      %1775 = vmatpush1.msra.mxu0 0.0
      %1776 = vmatprep.subr.mxu0 0.0
      %1777 = vmatpush1.msra.mxu0 0.0
      %1778 = vmatprep.subr.mxu0 0.0
      %1779 = vmatpush1.msra.mxu0 0.0
      %1780 = vmatprep.subr.mxu0 0.0
      %1781 = vmatpush1.msra.mxu0 0.0
      %1782 = vmatprep.mubr.f32.mxu0 0.0
      %1783 = vmatmul.mubr.f32.gmra.mrb[0].mxu0 %v1716
      %v1784 = vpop.f32.mrb[0].mxu0
      %v1785 = vadd.f32 0.0, %v1784
      %v1786 = vpop.f32.mrb[0].mxu0
      %1787 = vdwg.mxu0
      %1788 = vmatprep.subr.mxu0 0.0
      %1789 = vmatpush1.msra.mxu0 %v210
      %1790 = vmatprep.subr.mxu0 0.0
      %1791 = vmatpush1.msra.mxu0 %v211
      %1792 = vmatprep.subr.mxu0 0.0
      %1793 = vmatpush1.msra.mxu0 %v212
      %1794 = vmatprep.subr.mxu0 0.0
      %1795 = vmatpush1.msra.mxu0 %v213
      %1796 = vmatprep.subr.mxu0 0.0
      %1797 = vmatpush1.msra.mxu0 0.0
      %1798 = vmatprep.subr.mxu0 0.0
      %1799 = vmatpush1.msra.mxu0 0.0
      %1800 = vmatprep.subr.mxu0 0.0
      %1801 = vmatpush1.msra.mxu0 0.0
      %1802 = vmatprep.subr.mxu0 0.0
      %1803 = vmatpush1.msra.mxu0 0.0
      %1804 = vmatprep.subr.mxu0 0.0
      %1805 = vmatpush1.msra.mxu0 0.0
      %1806 = vmatprep.subr.mxu0 0.0
      %1807 = vmatpush1.msra.mxu0 0.0
      %1808 = vmatprep.subr.mxu0 0.0
      %1809 = vmatpush1.msra.mxu0 0.0
      %1810 = vmatprep.subr.mxu0 0.0
      %1811 = vmatpush1.msra.mxu0 0.0
      %1812 = vmatprep.subr.mxu0 0.0
      %1813 = vmatpush1.msra.mxu0 0.0
      %1814 = vmatprep.subr.mxu0 0.0
      %1815 = vmatpush1.msra.mxu0 0.0
      %1816 = vmatprep.subr.mxu0 0.0
      %1817 = vmatpush1.msra.mxu0 0.0
      %1818 = vmatprep.subr.mxu0 0.0
      %1819 = vmatpush1.msra.mxu0 0.0
      %1820 = vmatprep.subr.mxu0 0.0
      %1821 = vmatpush1.msra.mxu0 0.0
      %1822 = vmatprep.subr.mxu0 0.0
      %1823 = vmatpush1.msra.mxu0 0.0
      %1824 = vmatprep.subr.mxu0 0.0
      %1825 = vmatpush1.msra.mxu0 0.0
      %1826 = vmatprep.subr.mxu0 0.0
      %1827 = vmatpush1.msra.mxu0 0.0
      %1828 = vmatprep.subr.mxu0 0.0
      %1829 = vmatpush1.msra.mxu0 0.0
      %1830 = vmatprep.subr.mxu0 0.0
      %1831 = vmatpush1.msra.mxu0 0.0
      %1832 = vmatprep.subr.mxu0 0.0
      %1833 = vmatpush1.msra.mxu0 0.0
      %1834 = vmatprep.subr.mxu0 0.0
      %1835 = vmatpush1.msra.mxu0 0.0
      %1836 = vmatprep.subr.mxu0 0.0
      %1837 = vmatpush1.msra.mxu0 0.0
      %1838 = vmatprep.subr.mxu0 0.0
      %1839 = vmatpush1.msra.mxu0 0.0
      %1840 = vmatprep.subr.mxu0 0.0
      %1841 = vmatpush1.msra.mxu0 0.0
      %1842 = vmatprep.subr.mxu0 0.0
      %1843 = vmatpush1.msra.mxu0 0.0
      %1844 = vmatprep.subr.mxu0 0.0
      %1845 = vmatpush1.msra.mxu0 0.0
      %1846 = vmatprep.subr.mxu0 0.0
      %1847 = vmatpush1.msra.mxu0 0.0
      %1848 = vmatprep.subr.mxu0 0.0
      %1849 = vmatpush1.msra.mxu0 0.0
      %1850 = vmatprep.subr.mxu0 0.0
      %1851 = vmatpush1.msra.mxu0 0.0
      %1852 = vmatprep.mubr.f32.mxu0 0.0
      %1853 = vmatmul.mubr.f32.gmra.mrb[0].mxu0 %v1716
      %v1854 = vpop.f32.mrb[0].mxu0
      %v1855 = vadd.f32 0.0, %v1854
      %v1856 = vpop.f32.mrb[0].mxu0
      %1857 = vdwg.mxu0
      %1858 = vmatprep.subr.mxu0 0.0
      %1859 = vmatpush1.msra.mxu0 %v215
      %1860 = vmatprep.subr.mxu0 0.0
      %1861 = vmatpush1.msra.mxu0 %v216
      %1862 = vmatprep.subr.mxu0 0.0
      %1863 = vmatpush1.msra.mxu0 %v217
      %1864 = vmatprep.subr.mxu0 0.0
      %1865 = vmatpush1.msra.mxu0 %v218
      %1866 = vmatprep.subr.mxu0 0.0
      %1867 = vmatpush1.msra.mxu0 0.0
      %1868 = vmatprep.subr.mxu0 0.0
      %1869 = vmatpush1.msra.mxu0 0.0
      %1870 = vmatprep.subr.mxu0 0.0
      %1871 = vmatpush1.msra.mxu0 0.0
      %1872 = vmatprep.subr.mxu0 0.0
      %1873 = vmatpush1.msra.mxu0 0.0
      %1874 = vmatprep.subr.mxu0 0.0
      %1875 = vmatpush1.msra.mxu0 0.0
      %1876 = vmatprep.subr.mxu0 0.0
      %1877 = vmatpush1.msra.mxu0 0.0
      %1878 = vmatprep.subr.mxu0 0.0
      %1879 = vmatpush1.msra.mxu0 0.0
      %1880 = vmatprep.subr.mxu0 0.0
      %1881 = vmatpush1.msra.mxu0 0.0
      %1882 = vmatprep.subr.mxu0 0.0
      %1883 = vmatpush1.msra.mxu0 0.0
      %1884 = vmatprep.subr.mxu0 0.0
      %1885 = vmatpush1.msra.mxu0 0.0
      %1886 = vmatprep.subr.mxu0 0.0
      %1887 = vmatpush1.msra.mxu0 0.0
      %1888 = vmatprep.subr.mxu0 0.0
      %1889 = vmatpush1.msra.mxu0 0.0
      %1890 = vmatprep.subr.mxu0 0.0
      %1891 = vmatpush1.msra.mxu0 0.0
      %1892 = vmatprep.subr.mxu0 0.0
      %1893 = vmatpush1.msra.mxu0 0.0
      %1894 = vmatprep.subr.mxu0 0.0
      %1895 = vmatpush1.msra.mxu0 0.0
      %1896 = vmatprep.subr.mxu0 0.0
      %1897 = vmatpush1.msra.mxu0 0.0
      %1898 = vmatprep.subr.mxu0 0.0
      %1899 = vmatpush1.msra.mxu0 0.0
      %1900 = vmatprep.subr.mxu0 0.0
      %1901 = vmatpush1.msra.mxu0 0.0
      %1902 = vmatprep.subr.mxu0 0.0
      %1903 = vmatpush1.msra.mxu0 0.0
      %1904 = vmatprep.subr.mxu0 0.0
      %1905 = vmatpush1.msra.mxu0 0.0
      %1906 = vmatprep.subr.mxu0 0.0
      %1907 = vmatpush1.msra.mxu0 0.0
      %1908 = vmatprep.subr.mxu0 0.0
      %1909 = vmatpush1.msra.mxu0 0.0
      %1910 = vmatprep.subr.mxu0 0.0
      %1911 = vmatpush1.msra.mxu0 0.0
      %1912 = vmatprep.subr.mxu0 0.0
      %1913 = vmatpush1.msra.mxu0 0.0
      %1914 = vmatprep.subr.mxu0 0.0
      %1915 = vmatpush1.msra.mxu0 0.0
      %1916 = vmatprep.subr.mxu0 0.0
      %1917 = vmatpush1.msra.mxu0 0.0
      %1918 = vmatprep.subr.mxu0 0.0
      %1919 = vmatpush1.msra.mxu0 0.0
      %1920 = vmatprep.subr.mxu0 0.0
      %1921 = vmatpush1.msra.mxu0 0.0
      %1922 = vmatprep.mubr.f32.mxu0 0.0
      %1923 = vmatmul.mubr.f32.gmra.mrb[0].mxu0 %v1716
      %v1924 = vpop.f32.mrb[0].mxu0
      %v1925 = vadd.f32 %v379, %v1924
      %v1926 = vpop.f32.mrb[0].mxu0
      %1927 = vdwg.mxu0
      %v1928 = vadd.f32 %v1708, %v1785
      %v1929 = vxor.u32 %v1928, 2147483648
      %v1930 = vmul.f32 %v1929, 1.442695
      %v1931 = vpow.pop %v1930
      %v1932 = vadd.f32 %v1931, 1.0
      %v1933 = vrcp.pop %v1932
      %v1934 = vmul.f32 1.0, %v1933
      %v1935 = vadd.f32 %v1711, %v1855
      %v1936 = vxor.u32 %v1935, 2147483648
      %v1937 = vmul.f32 %v1936, 1.442695
      %v1938 = vpow.pop %v1937
      %v1939 = vadd.f32 %v1938, 1.0
      %v1940 = vrcp.pop %v1939
      %v1941 = vmul.f32 1.0, %v1940
      %v1942 = vmul.f32 %v1934, %v1925
      %v1943 = vadd.f32 %v1714, %v1942
      %v1944 = vtanh.pop %v1943
      %v1945 = vsub.f32 1.0, %v1941
      %v1946 = vmul.f32 %v1945, %v1944
      %v1947 = vmul.f32 %v1941, %v1702
      %v1948 = vadd.f32 %v1946, %v1947
      %s1949 = scalar_lea.vmem %s204, %s1706
      %1950 = vst.msk [vmem:[%s1949] sm:$0x3] %vm473, %v1948
      %s1951 = scalar_select %p220, 7, 0
      %s1952 = smul.u32 %s1951, 2
      %s1953 = scalar_lea.vmem %s191, %s1952
      %v1954 = vld [vmem:[%s1953] sm:$0x3]
      %s1955 = sadd.s32 %s1952, 16
      %s1956 = scalar_lea.vmem %s191, %s1955
      %v1957 = vld [vmem:[%s1956] sm:$0x3]
      %s1958 = sadd.s32 %s1952, 32
      %s1959 = scalar_lea.vmem %s191, %s1958
      %v1960 = vld [vmem:[%s1959] sm:$0x3]
      %v1962 = vsel %vm231, %v1948, 0
      %1964 = vmatprep.subr.mxu0 0.0
      %1965 = vmatpush1.msra.mxu0 %v205
      %1966 = vmatprep.subr.mxu0 0.0
      %1967 = vmatpush1.msra.mxu0 %v206
      %1968 = vmatprep.subr.mxu0 0.0
      %1969 = vmatpush1.msra.mxu0 %v207
      %1970 = vmatprep.subr.mxu0 0.0
      %1971 = vmatpush1.msra.mxu0 %v208
      %1972 = vmatprep.subr.mxu0 0.0
      %1973 = vmatpush1.msra.mxu0 0.0
      %1974 = vmatprep.subr.mxu0 0.0
      %1975 = vmatpush1.msra.mxu0 0.0
      %1976 = vmatprep.subr.mxu0 0.0
      %1977 = vmatpush1.msra.mxu0 0.0
      %1978 = vmatprep.subr.mxu0 0.0
      %1979 = vmatpush1.msra.mxu0 0.0
      %1980 = vmatprep.subr.mxu0 0.0
      %1981 = vmatpush1.msra.mxu0 0.0
      %1982 = vmatprep.subr.mxu0 0.0
      %1983 = vmatpush1.msra.mxu0 0.0
      %1984 = vmatprep.subr.mxu0 0.0
      %1985 = vmatpush1.msra.mxu0 0.0
      %1986 = vmatprep.subr.mxu0 0.0
      %1987 = vmatpush1.msra.mxu0 0.0
      %1988 = vmatprep.subr.mxu0 0.0
      %1989 = vmatpush1.msra.mxu0 0.0
      %1990 = vmatprep.subr.mxu0 0.0
      %1991 = vmatpush1.msra.mxu0 0.0
      %1992 = vmatprep.subr.mxu0 0.0
      %1993 = vmatpush1.msra.mxu0 0.0
      %1994 = vmatprep.subr.mxu0 0.0
      %1995 = vmatpush1.msra.mxu0 0.0
      %1996 = vmatprep.subr.mxu0 0.0
      %1997 = vmatpush1.msra.mxu0 0.0
      %1998 = vmatprep.subr.mxu0 0.0
      %1999 = vmatpush1.msra.mxu0 0.0
      %2000 = vmatprep.subr.mxu0 0.0
      %2001 = vmatpush1.msra.mxu0 0.0
      %2002 = vmatprep.subr.mxu0 0.0
      %2003 = vmatpush1.msra.mxu0 0.0
      %2004 = vmatprep.subr.mxu0 0.0
      %2005 = vmatpush1.msra.mxu0 0.0
      %2006 = vmatprep.subr.mxu0 0.0
      %2007 = vmatpush1.msra.mxu0 0.0
      %2008 = vmatprep.subr.mxu0 0.0
      %2009 = vmatpush1.msra.mxu0 0.0
      %2010 = vmatprep.subr.mxu0 0.0
      %2011 = vmatpush1.msra.mxu0 0.0
      %2012 = vmatprep.subr.mxu0 0.0
      %2013 = vmatpush1.msra.mxu0 0.0
      %2014 = vmatprep.subr.mxu0 0.0
      %2015 = vmatpush1.msra.mxu0 0.0
      %2016 = vmatprep.subr.mxu0 0.0
      %2017 = vmatpush1.msra.mxu0 0.0
      %2018 = vmatprep.subr.mxu0 0.0
      %2019 = vmatpush1.msra.mxu0 0.0
      %2020 = vmatprep.subr.mxu0 0.0
      %2021 = vmatpush1.msra.mxu0 0.0
      %2022 = vmatprep.subr.mxu0 0.0
      %2023 = vmatpush1.msra.mxu0 0.0
      %2024 = vmatprep.subr.mxu0 0.0
      %2025 = vmatpush1.msra.mxu0 0.0
      %2026 = vmatprep.subr.mxu0 0.0
      %2027 = vmatpush1.msra.mxu0 0.0
      %2028 = vmatprep.mubr.f32.mxu0 0.0
      %2029 = vmatmul.mubr.f32.gmra.mrb[0].mxu0 %v1962
      %v2030 = vpop.f32.mrb[0].mxu0
      %v2031 = vadd.f32 0.0, %v2030
      %v2032 = vpop.f32.mrb[0].mxu0
      %2033 = vdwg.mxu0
      %2034 = vmatprep.subr.mxu0 0.0
      %2035 = vmatpush1.msra.mxu0 %v210
      %2036 = vmatprep.subr.mxu0 0.0
      %2037 = vmatpush1.msra.mxu0 %v211
      %2038 = vmatprep.subr.mxu0 0.0
      %2039 = vmatpush1.msra.mxu0 %v212
      %2040 = vmatprep.subr.mxu0 0.0
      %2041 = vmatpush1.msra.mxu0 %v213
      %2042 = vmatprep.subr.mxu0 0.0
      %2043 = vmatpush1.msra.mxu0 0.0
      %2044 = vmatprep.subr.mxu0 0.0
      %2045 = vmatpush1.msra.mxu0 0.0
      %2046 = vmatprep.subr.mxu0 0.0
      %2047 = vmatpush1.msra.mxu0 0.0
      %2048 = vmatprep.subr.mxu0 0.0
      %2049 = vmatpush1.msra.mxu0 0.0
      %2050 = vmatprep.subr.mxu0 0.0
      %2051 = vmatpush1.msra.mxu0 0.0
      %2052 = vmatprep.subr.mxu0 0.0
      %2053 = vmatpush1.msra.mxu0 0.0
      %2054 = vmatprep.subr.mxu0 0.0
      %2055 = vmatpush1.msra.mxu0 0.0
      %2056 = vmatprep.subr.mxu0 0.0
      %2057 = vmatpush1.msra.mxu0 0.0
      %2058 = vmatprep.subr.mxu0 0.0
      %2059 = vmatpush1.msra.mxu0 0.0
      %2060 = vmatprep.subr.mxu0 0.0
      %2061 = vmatpush1.msra.mxu0 0.0
      %2062 = vmatprep.subr.mxu0 0.0
      %2063 = vmatpush1.msra.mxu0 0.0
      %2064 = vmatprep.subr.mxu0 0.0
      %2065 = vmatpush1.msra.mxu0 0.0
      %2066 = vmatprep.subr.mxu0 0.0
      %2067 = vmatpush1.msra.mxu0 0.0
      %2068 = vmatprep.subr.mxu0 0.0
      %2069 = vmatpush1.msra.mxu0 0.0
      %2070 = vmatprep.subr.mxu0 0.0
      %2071 = vmatpush1.msra.mxu0 0.0
      %2072 = vmatprep.subr.mxu0 0.0
      %2073 = vmatpush1.msra.mxu0 0.0
      %2074 = vmatprep.subr.mxu0 0.0
      %2075 = vmatpush1.msra.mxu0 0.0
      %2076 = vmatprep.subr.mxu0 0.0
      %2077 = vmatpush1.msra.mxu0 0.0
      %2078 = vmatprep.subr.mxu0 0.0
      %2079 = vmatpush1.msra.mxu0 0.0
      %2080 = vmatprep.subr.mxu0 0.0
      %2081 = vmatpush1.msra.mxu0 0.0
      %2082 = vmatprep.subr.mxu0 0.0
      %2083 = vmatpush1.msra.mxu0 0.0
      %2084 = vmatprep.subr.mxu0 0.0
      %2085 = vmatpush1.msra.mxu0 0.0
      %2086 = vmatprep.subr.mxu0 0.0
      %2087 = vmatpush1.msra.mxu0 0.0
      %2088 = vmatprep.subr.mxu0 0.0
      %2089 = vmatpush1.msra.mxu0 0.0
      %2090 = vmatprep.subr.mxu0 0.0
      %2091 = vmatpush1.msra.mxu0 0.0
      %2092 = vmatprep.subr.mxu0 0.0
      %2093 = vmatpush1.msra.mxu0 0.0
      %2094 = vmatprep.subr.mxu0 0.0
      %2095 = vmatpush1.msra.mxu0 0.0
      %2096 = vmatprep.subr.mxu0 0.0
      %2097 = vmatpush1.msra.mxu0 0.0
      %2098 = vmatprep.mubr.f32.mxu0 0.0
      %2099 = vmatmul.mubr.f32.gmra.mrb[0].mxu0 %v1962
      %v2100 = vpop.f32.mrb[0].mxu0
      %v2101 = vadd.f32 0.0, %v2100
      %v2102 = vpop.f32.mrb[0].mxu0
      %2103 = vdwg.mxu0
      %2104 = vmatprep.subr.mxu0 0.0
      %2105 = vmatpush1.msra.mxu0 %v215
      %2106 = vmatprep.subr.mxu0 0.0
      %2107 = vmatpush1.msra.mxu0 %v216
      %2108 = vmatprep.subr.mxu0 0.0
      %2109 = vmatpush1.msra.mxu0 %v217
      %2110 = vmatprep.subr.mxu0 0.0
      %2111 = vmatpush1.msra.mxu0 %v218
      %2112 = vmatprep.subr.mxu0 0.0
      %2113 = vmatpush1.msra.mxu0 0.0
      %2114 = vmatprep.subr.mxu0 0.0
      %2115 = vmatpush1.msra.mxu0 0.0
      %2116 = vmatprep.subr.mxu0 0.0
      %2117 = vmatpush1.msra.mxu0 0.0
      %2118 = vmatprep.subr.mxu0 0.0
      %2119 = vmatpush1.msra.mxu0 0.0
      %2120 = vmatprep.subr.mxu0 0.0
      %2121 = vmatpush1.msra.mxu0 0.0
      %2122 = vmatprep.subr.mxu0 0.0
      %2123 = vmatpush1.msra.mxu0 0.0
      %2124 = vmatprep.subr.mxu0 0.0
      %2125 = vmatpush1.msra.mxu0 0.0
      %2126 = vmatprep.subr.mxu0 0.0
      %2127 = vmatpush1.msra.mxu0 0.0
      %2128 = vmatprep.subr.mxu0 0.0
      %2129 = vmatpush1.msra.mxu0 0.0
      %2130 = vmatprep.subr.mxu0 0.0
      %2131 = vmatpush1.msra.mxu0 0.0
      %2132 = vmatprep.subr.mxu0 0.0
      %2133 = vmatpush1.msra.mxu0 0.0
      %2134 = vmatprep.subr.mxu0 0.0
      %2135 = vmatpush1.msra.mxu0 0.0
      %2136 = vmatprep.subr.mxu0 0.0
      %2137 = vmatpush1.msra.mxu0 0.0
      %2138 = vmatprep.subr.mxu0 0.0
      %2139 = vmatpush1.msra.mxu0 0.0
      %2140 = vmatprep.subr.mxu0 0.0
      %2141 = vmatpush1.msra.mxu0 0.0
      %2142 = vmatprep.subr.mxu0 0.0
      %2143 = vmatpush1.msra.mxu0 0.0
      %2144 = vmatprep.subr.mxu0 0.0
      %2145 = vmatpush1.msra.mxu0 0.0
      %2146 = vmatprep.subr.mxu0 0.0
      %2147 = vmatpush1.msra.mxu0 0.0
      %2148 = vmatprep.subr.mxu0 0.0
      %2149 = vmatpush1.msra.mxu0 0.0
      %2150 = vmatprep.subr.mxu0 0.0
      %2151 = vmatpush1.msra.mxu0 0.0
      %2152 = vmatprep.subr.mxu0 0.0
      %2153 = vmatpush1.msra.mxu0 0.0
      %2154 = vmatprep.subr.mxu0 0.0
      %2155 = vmatpush1.msra.mxu0 0.0
      %2156 = vmatprep.subr.mxu0 0.0
      %2157 = vmatpush1.msra.mxu0 0.0
      %2158 = vmatprep.subr.mxu0 0.0
      %2159 = vmatpush1.msra.mxu0 0.0
      %2160 = vmatprep.subr.mxu0 0.0
      %2161 = vmatpush1.msra.mxu0 0.0
      %2162 = vmatprep.subr.mxu0 0.0
      %2163 = vmatpush1.msra.mxu0 0.0
      %2164 = vmatprep.subr.mxu0 0.0
      %2165 = vmatpush1.msra.mxu0 0.0
      %2166 = vmatprep.subr.mxu0 0.0
      %2167 = vmatpush1.msra.mxu0 0.0
      %2168 = vmatprep.mubr.f32.mxu0 0.0
      %2169 = vmatmul.mubr.f32.gmra.mrb[0].mxu0 %v1962
      %v2170 = vpop.f32.mrb[0].mxu0
      %v2171 = vadd.f32 %v379, %v2170
      %v2172 = vpop.f32.mrb[0].mxu0
      %2173 = vdwg.mxu0
      %v2174 = vadd.f32 %v1954, %v2031
      %v2175 = vxor.u32 %v2174, 2147483648
      %v2176 = vmul.f32 %v2175, 1.442695
      %v2177 = vpow.pop %v2176
      %v2178 = vadd.f32 %v2177, 1.0
      %v2179 = vrcp.pop %v2178
      %v2180 = vmul.f32 1.0, %v2179
      %v2181 = vadd.f32 %v1957, %v2101
      %v2182 = vxor.u32 %v2181, 2147483648
      %v2183 = vmul.f32 %v2182, 1.442695
      %v2184 = vpow.pop %v2183
      %v2185 = vadd.f32 %v2184, 1.0
      %v2186 = vrcp.pop %v2185
      %v2187 = vmul.f32 1.0, %v2186
      %v2188 = vmul.f32 %v2180, %v2171
      %v2189 = vadd.f32 %v1960, %v2188
      %v2190 = vtanh.pop %v2189
      %v2191 = vsub.f32 1.0, %v2187
      %v2192 = vmul.f32 %v2191, %v2190
      %v2193 = vmul.f32 %v2187, %v1948
      %v2194 = vadd.f32 %v2192, %v2193
      %s2195 = scalar_lea.vmem %s204, %s1952
      %2196 = vst.msk [vmem:[%s2195] sm:$0x3] %vm473, %v2194
      %p2197 = scmp.lt.s32.totalorder %s14, 1
      %s2198 = scalar_select %p2197, %s14, 1
      %s2199 = smul.addr %s2198, 8
      %s2200 = smul.addr %s2199, 2
      %s2201 = scalar_lea.vmem %s3, %s2200
      // Predicated region
      $region33: #{video_encoder_forward.1} parent=31 // pred_check
        %p2202 = pneg %p110
      $region34: #{video_encoder_forward.1} parent=31 // pred_check_branch
        %2204 = sbr.rel (%p2202) target = $region36
      $region35: #{video_encoder_forward.1} parent=31 // pred_region
        _
      $region36: #{video_encoder_forward.1} parent=31 // pred_fallthru
        _
    $region32: #{video_encoder_forward.1} parent=5 // pred_fallthru
      _
    %p2205 = scmp.le.s32.totalorder 2, %s9
    // Predicated region
    $region37: #{video_encoder_forward.1} parent=5 // pred_check
      %p2206 = pneg %p2205
    $region38: #{video_encoder_forward.1} parent=5 // pred_check_branch
      %2208 = sbr.rel (%p2206) target = $region40
    $region39: #{video_encoder_forward.1} parent=5 // pred_region
      %s2209 = ssub.s32 %s9, 2
      // Predicated region
      $region41: #{video_encoder_forward.1} parent=39 // pred_check
        %p2210 = pneg %p116
      $region42: #{video_encoder_forward.1} parent=39 // pred_check_branch
        %2212 = sbr.rel (%p2210) target = $region44
      $region43: #{video_encoder_forward.1} parent=39 // pred_region
        %p2213 = scmp.lt.s32.totalorder %s15, 1
        %s2214 = scalar_select %p2213, %s15, 1
        %s2215 = smul.addr %s2214, 8
        %s2216 = smul.addr %s2215, 2
        %s2217 = scalar_lea.vmem %s3, %s2216
      $region44: #{video_encoder_forward.1} parent=39 // pred_fallthru
        _
    $region40: #{video_encoder_forward.1} parent=5 // pred_fallthru
      _
  $region6: #{video_encoder_forward.1} parent=0 // loop_footer
    %s13 = sadd.s32 1, %s9
  $region7: #{video_encoder_forward.1} parent=0 // loop_footer_branch
    %8 = sbr.rel target = $region3
  $region8: #{video_encoder_forward.1} parent=0 // loop_exit
    _

</llo_original>
